<compile_context>
chip_gen: v7x
topology: tpu7x:2x2x1
jax: 0.10.0
libtpu: 0.0.40
codegen_flags: <defaults>
</compile_context>

<pallas_src>
import jax
import jax.numpy as jnp
from jax.experimental import pallas as pl
from jax.experimental.pallas import tpu as pltpu  # noqa: F401  (TPU backend)


def gru_kernel(gi_r_ref, gi_z_ref, gi_n_ref,
               whh_r_ref, whh_z_ref, whh_n_ref,
               bhh_n_ref, h0_ref,
               out_ref, hn_ref):
    """Single invocation: lax.fori_loop over T; hidden state carried as a loop value."""
    T = gi_r_ref.shape[0]

    # Loop-invariant operands: load once, keep resident.
    whh_r = whh_r_ref[...]      # [H, H]
    whh_z = whh_z_ref[...]      # [H, H]
    whh_n = whh_n_ref[...]      # [H, H]
    bhh_n = bhh_n_ref[...]      # [1, H]

    def step(t, h):
        # Recurrent projections — the only matmuls left on the serial path.
        gh_r = jnp.dot(h, whh_r, preferred_element_type=jnp.float32)
        gh_z = jnp.dot(h, whh_z, preferred_element_type=jnp.float32)
        gh_n = jnp.dot(h, whh_n, preferred_element_type=jnp.float32) + bhh_n
        # gi_* already contain x@W_ih^T + b_ih (+ b_hh folded in for r/z).
        r = jax.nn.sigmoid(gi_r_ref[t] + gh_r)
        z = jax.nn.sigmoid(gi_z_ref[t] + gh_z)
        n = jnp.tanh(gi_n_ref[t] + r * gh_n)
        return (1.0 - z) * n + z * h

    h_last = jax.lax.fori_loop(0, T, step, h0_ref[...],
                               unroll=True if T <= 16 else False)

    # Written exactly once (no per-timestep stores).
    hn_ref[...] = h_last
    out_ref[...] = jnp.maximum(h_last, 0.0)   # relu(out_seq[:, -1])


def gru_forward(x, h0, w_ih, w_hh, b_ih, b_hh):
    """x: [B, T, D] f32, h0: [1, B, H] f32, PyTorch GRU params (gate order r,z,n).
       Returns (relu(out_seq[:, -1]) [B, H], h_n [1, B, H])."""
    B, T, D = x.shape
    H = h0.shape[-1]

    # Hoisted input projection: one big matmul over all T*B rows, produced
    # time-major so the kernel can index gi[t] with no extra transpose.
    gi = jnp.einsum('btd,gd->tbg', x, w_ih,
                    precision=jax.lax.Precision.HIGHEST)            # [T, B, 3H]

    # Gate-aligned split + bias folding.
    gi_r = gi[..., 0:H]     + (b_ih[0:H]       + b_hh[0:H])
    gi_z = gi[..., H:2 * H] + (b_ih[H:2 * H]   + b_hh[H:2 * H])
    gi_n = gi[..., 2 * H:]  + b_ih[2 * H:]
    bhh_n = b_hh[2 * H:].reshape(1, H)

    # Per-gate recurrent weights, pre-transposed so the kernel does h @ W^T.
    whh_r = jnp.transpose(w_hh[0:H])            # [H, H]
    whh_z = jnp.transpose(w_hh[H:2 * H])        # [H, H]
    whh_n = jnp.transpose(w_hh[2 * H:])         # [H, H]
    h0_2d = h0.reshape(B, H)                    # n_layers == 1

    # No grid: everything (a few KB here) lives in VMEM for the whole kernel;
    # default BlockSpecs map each whole array into VMEM.
    out, hn = pl.pallas_call(
        gru_kernel,
        out_shape=(jax.ShapeDtypeStruct((B, H), jnp.float32),   # relu(last h)
                   jax.ShapeDtypeStruct((B, H), jnp.float32)),  # h_n
    )(gi_r, gi_z, gi_n, whh_r, whh_z, whh_n, bhh_n, h0_2d)

    return out, hn.reshape(1, B, H)


def gru_reference(x, h0, w_ih, w_hh, b_ih, b_hh):
    """Pure-JAX reference matching torch.nn.GRU (1 layer, batch_first)."""
    H = h0.shape[-1]
    P = jax.lax.Precision.HIGHEST

    def step(h, x_t):
        gi = jnp.dot(x_t, w_ih.T, precision=P) + b_ih
        gh = jnp.dot(h, w_hh.T, precision=P) + b_hh
        r = jax.nn.sigmoid(gi[:, :H] + gh[:, :H])
        z = jax.nn.sigmoid(gi[:, H:2 * H] + gh[:, H:2 * H])
        n = jnp.tanh(gi[:, 2 * H:] + r * gh[:, 2 * H:])
        h_new = (1.0 - z) * n + z * h
        return h_new, h_new

    h_last, _ = jax.lax.scan(step, h0[0], jnp.transpose(x, (1, 0, 2)))
    return jnp.maximum(h_last, 0.0), h_last[None]


if __name__ == "__main__":
    # Small shapes consistent with the module: batch=2, seq=8, input_dim=16, hidden=32.
    B, T, D, H = 2, 8, 16, 32
    key = jax.random.PRNGKey(0)
    kx, k1, k2, k3, k4 = jax.random.split(key, 5)

    # PyTorch default init: U(-1/sqrt(H), 1/sqrt(H)) for all GRU weights & biases.
    bound = 1.0 / jnp.sqrt(jnp.float32(H))
    x = jax.random.normal(kx, (B, T, D), dtype=jnp.float32)
    w_ih = jax.random.uniform(k1, (3 * H, D), jnp.float32, -bound, bound)
    w_hh = jax.random.uniform(k2, (3 * H, H), jnp.float32, -bound, bound)
    b_ih = jax.random.uniform(k3, (3 * H,), jnp.float32, -bound, bound)
    b_hh = jax.random.uniform(k4, (3 * H,), jnp.float32, -bound, bound)
    h0 = jnp.zeros((1, B, H), jnp.float32)     # init_hidden()

    out, h_n = gru_forward(x, h0, w_ih, w_hh, b_ih, b_hh)
    out = jax.block_until_ready(out)
    h_n = jax.block_until_ready(h_n)

    out_ref, h_ref = gru_reference(x, h0, w_ih, w_hh, b_ih, b_hh)
    assert out.shape == (B, H) and h_n.shape == (1, B, H)
    assert jnp.allclose(out, out_ref, atol=1e-4, rtol=1e-4)
    assert jnp.allclose(h_n, h_ref, atol=1e-4, rtol=1e-4)

    # TODO(synk): drop_prob is unused — PyTorch applies inter-layer dropout only
    # when n_layers > 1, and this module uses n_layers=1.
    print("KERNEL_OK")
</pallas_src>

<mosaic_0001>
module attributes {stable_mosaic.version = 11 : i64} {
  func.func @gru_kernel(%arg0: memref<8x2x32xf32, #tpu.memory_space<vmem>>, %arg1: memref<8x2x32xf32, #tpu.memory_space<vmem>>, %arg2: memref<8x2x32xf32, #tpu.memory_space<vmem>>, %arg3: memref<32x32xf32, #tpu.memory_space<vmem>>, %arg4: memref<32x32xf32, #tpu.memory_space<vmem>>, %arg5: memref<32x32xf32, #tpu.memory_space<vmem>>, %arg6: memref<1x32xf32, #tpu.memory_space<vmem>>, %arg7: memref<2x32xf32, #tpu.memory_space<vmem>>, %arg8: memref<2x32xf32, #tpu.memory_space<vmem>>, %arg9: memref<2x32xf32, #tpu.memory_space<vmem>>) attributes {dimension_semantics = [], scalar_prefetch = 0 : i64, scratch_operands = 0 : i64, tpu.core_type = #tpu.core_type<tc>} {
    %c0 = arith.constant 0 : index
    %c0_0 = arith.constant 0 : index
    %0 = vector.load %arg3[%c0, %c0_0] : memref<32x32xf32, #tpu.memory_space<vmem>>, vector<32x32xf32>
    %c0_1 = arith.constant 0 : index
    %c0_2 = arith.constant 0 : index
    %1 = vector.load %arg4[%c0_1, %c0_2] : memref<32x32xf32, #tpu.memory_space<vmem>>, vector<32x32xf32>
    %c0_3 = arith.constant 0 : index
    %c0_4 = arith.constant 0 : index
    %2 = vector.load %arg5[%c0_3, %c0_4] : memref<32x32xf32, #tpu.memory_space<vmem>>, vector<32x32xf32>
    %c0_5 = arith.constant 0 : index
    %c0_6 = arith.constant 0 : index
    %3 = vector.load %arg6[%c0_5, %c0_6] : memref<1x32xf32, #tpu.memory_space<vmem>>, vector<1x32xf32>
    %c0_7 = arith.constant 0 : index
    %c0_8 = arith.constant 0 : index
    %4 = vector.load %arg7[%c0_7, %c0_8] : memref<2x32xf32, #tpu.memory_space<vmem>>, vector<2x32xf32>
    %c0_i32 = arith.constant 0 : i32
    %cst = arith.constant dense<0.000000e+00> : vector<2x32xf32>
    %5 = tpu.matmul %4, %0, %cst {dimension_numbers = #tpu.dot_dimension_numbers<[1], [0], [0], [1], [0, 0, 1, 1], [], []>} : vector<2x32xf32>, vector<32x32xf32>, vector<2x32xf32> -> vector<2x32xf32>
    %cst_9 = arith.constant dense<0.000000e+00> : vector<2x32xf32>
    %6 = tpu.matmul %4, %1, %cst_9 {dimension_numbers = #tpu.dot_dimension_numbers<[1], [0], [0], [1], [0, 0, 1, 1], [], []>} : vector<2x32xf32>, vector<32x32xf32>, vector<2x32xf32> -> vector<2x32xf32>
    %cst_10 = arith.constant dense<0.000000e+00> : vector<2x32xf32>
    %7 = tpu.matmul %4, %2, %cst_10 {dimension_numbers = #tpu.dot_dimension_numbers<[1], [0], [0], [1], [0, 0, 1, 1], [], []>} : vector<2x32xf32>, vector<32x32xf32>, vector<2x32xf32> -> vector<2x32xf32>
    %8 = vector.broadcast %3 : vector<1x32xf32> to vector<2x32xf32>
    %9 = arith.addf %7, %8 : vector<2x32xf32>
    %10 = arith.index_cast %c0_i32 : i32 to index
    %c0_11 = arith.constant 0 : index
    %c0_12 = arith.constant 0 : index
    %11 = vector.load %arg0[%10, %c0_11, %c0_12] : memref<8x2x32xf32, #tpu.memory_space<vmem>>, vector<1x2x32xf32>
    %12 = vector.shape_cast %11 : vector<1x2x32xf32> to vector<2x32xf32>
    %13 = arith.addf %12, %5 : vector<2x32xf32>
    %14 = arith.negf %13 : vector<2x32xf32>
    %15 = math.exp %14 : vector<2x32xf32>
    %cst_13 = arith.constant 1.000000e+00 : f32
    %16 = vector.broadcast %cst_13 : f32 to vector<2x32xf32>
    %17 = arith.addf %16, %15 : vector<2x32xf32>
    %18 = arith.divf %16, %17 : vector<2x32xf32>
    %19 = arith.index_cast %c0_i32 : i32 to index
    %c0_14 = arith.constant 0 : index
    %c0_15 = arith.constant 0 : index
    %20 = vector.load %arg1[%19, %c0_14, %c0_15] : memref<8x2x32xf32, #tpu.memory_space<vmem>>, vector<1x2x32xf32>
    %21 = vector.shape_cast %20 : vector<1x2x32xf32> to vector<2x32xf32>
    %22 = arith.addf %21, %6 : vector<2x32xf32>
    %23 = arith.negf %22 : vector<2x32xf32>
    %24 = math.exp %23 : vector<2x32xf32>
    %cst_16 = arith.constant 1.000000e+00 : f32
    %25 = vector.broadcast %cst_16 : f32 to vector<2x32xf32>
    %26 = arith.addf %25, %24 : vector<2x32xf32>
    %27 = arith.divf %25, %26 : vector<2x32xf32>
    %28 = arith.index_cast %c0_i32 : i32 to index
    %c0_17 = arith.constant 0 : index
    %c0_18 = arith.constant 0 : index
    %29 = vector.load %arg2[%28, %c0_17, %c0_18] : memref<8x2x32xf32, #tpu.memory_space<vmem>>, vector<1x2x32xf32>
    %30 = vector.shape_cast %29 : vector<1x2x32xf32> to vector<2x32xf32>
    %31 = arith.mulf %18, %9 : vector<2x32xf32>
    %32 = arith.addf %30, %31 : vector<2x32xf32>
    %33 = math.tanh %32 : vector<2x32xf32>
    %cst_19 = arith.constant 1.000000e+00 : f32
    %34 = vector.broadcast %cst_19 : f32 to vector<2x32xf32>
    %35 = arith.subf %34, %27 : vector<2x32xf32>
    %36 = arith.mulf %35, %33 : vector<2x32xf32>
    %37 = arith.mulf %27, %4 : vector<2x32xf32>
    %38 = arith.addf %36, %37 : vector<2x32xf32>
    %c1_i32 = arith.constant 1 : i32
    %cst_20 = arith.constant dense<0.000000e+00> : vector<2x32xf32>
    %39 = tpu.matmul %38, %0, %cst_20 {dimension_numbers = #tpu.dot_dimension_numbers<[1], [0], [0], [1], [0, 0, 1, 1], [], []>} : vector<2x32xf32>, vector<32x32xf32>, vector<2x32xf32> -> vector<2x32xf32>
    %cst_21 = arith.constant dense<0.000000e+00> : vector<2x32xf32>
    %40 = tpu.matmul %38, %1, %cst_21 {dimension_numbers = #tpu.dot_dimension_numbers<[1], [0], [0], [1], [0, 0, 1, 1], [], []>} : vector<2x32xf32>, vector<32x32xf32>, vector<2x32xf32> -> vector<2x32xf32>
    %cst_22 = arith.constant dense<0.000000e+00> : vector<2x32xf32>
    %41 = tpu.matmul %38, %2, %cst_22 {dimension_numbers = #tpu.dot_dimension_numbers<[1], [0], [0], [1], [0, 0, 1, 1], [], []>} : vector<2x32xf32>, vector<32x32xf32>, vector<2x32xf32> -> vector<2x32xf32>
    %42 = vector.broadcast %3 : vector<1x32xf32> to vector<2x32xf32>
    %43 = arith.addf %41, %42 : vector<2x32xf32>
    %44 = arith.index_cast %c1_i32 : i32 to index
    %c0_23 = arith.constant 0 : index
    %c0_24 = arith.constant 0 : index
    %45 = vector.load %arg0[%44, %c0_23, %c0_24] : memref<8x2x32xf32, #tpu.memory_space<vmem>>, vector<1x2x32xf32>
    %46 = vector.shape_cast %45 : vector<1x2x32xf32> to vector<2x32xf32>
    %47 = arith.addf %46, %39 : vector<2x32xf32>
    %48 = arith.negf %47 : vector<2x32xf32>
    %49 = math.exp %48 : vector<2x32xf32>
    %cst_25 = arith.constant 1.000000e+00 : f32
    %50 = vector.broadcast %cst_25 : f32 to vector<2x32xf32>
    %51 = arith.addf %50, %49 : vector<2x32xf32>
    %52 = arith.divf %50, %51 : vector<2x32xf32>
    %53 = arith.index_cast %c1_i32 : i32 to index
    %c0_26 = arith.constant 0 : index
    %c0_27 = arith.constant 0 : index
    %54 = vector.load %arg1[%53, %c0_26, %c0_27] : memref<8x2x32xf32, #tpu.memory_space<vmem>>, vector<1x2x32xf32>
    %55 = vector.shape_cast %54 : vector<1x2x32xf32> to vector<2x32xf32>
    %56 = arith.addf %55, %40 : vector<2x32xf32>
    %57 = arith.negf %56 : vector<2x32xf32>
    %58 = math.exp %57 : vector<2x32xf32>
    %cst_28 = arith.constant 1.000000e+00 : f32
    %59 = vector.broadcast %cst_28 : f32 to vector<2x32xf32>
    %60 = arith.addf %59, %58 : vector<2x32xf32>
    %61 = arith.divf %59, %60 : vector<2x32xf32>
    %62 = arith.index_cast %c1_i32 : i32 to index
    %c0_29 = arith.constant 0 : index
    %c0_30 = arith.constant 0 : index
    %63 = vector.load %arg2[%62, %c0_29, %c0_30] : memref<8x2x32xf32, #tpu.memory_space<vmem>>, vector<1x2x32xf32>
    %64 = vector.shape_cast %63 : vector<1x2x32xf32> to vector<2x32xf32>
    %65 = arith.mulf %52, %43 : vector<2x32xf32>
    %66 = arith.addf %64, %65 : vector<2x32xf32>
    %67 = math.tanh %66 : vector<2x32xf32>
    %cst_31 = arith.constant 1.000000e+00 : f32
    %68 = vector.broadcast %cst_31 : f32 to vector<2x32xf32>
    %69 = arith.subf %68, %61 : vector<2x32xf32>
    %70 = arith.mulf %69, %67 : vector<2x32xf32>
    %71 = arith.mulf %61, %38 : vector<2x32xf32>
    %72 = arith.addf %70, %71 : vector<2x32xf32>
    %c2_i32 = arith.constant 2 : i32
    %cst_32 = arith.constant dense<0.000000e+00> : vector<2x32xf32>
    %73 = tpu.matmul %72, %0, %cst_32 {dimension_numbers = #tpu.dot_dimension_numbers<[1], [0], [0], [1], [0, 0, 1, 1], [], []>} : vector<2x32xf32>, vector<32x32xf32>, vector<2x32xf32> -> vector<2x32xf32>
    %cst_33 = arith.constant dense<0.000000e+00> : vector<2x32xf32>
    %74 = tpu.matmul %72, %1, %cst_33 {dimension_numbers = #tpu.dot_dimension_numbers<[1], [0], [0], [1], [0, 0, 1, 1], [], []>} : vector<2x32xf32>, vector<32x32xf32>, vector<2x32xf32> -> vector<2x32xf32>
    %cst_34 = arith.constant dense<0.000000e+00> : vector<2x32xf32>
    %75 = tpu.matmul %72, %2, %cst_34 {dimension_numbers = #tpu.dot_dimension_numbers<[1], [0], [0], [1], [0, 0, 1, 1], [], []>} : vector<2x32xf32>, vector<32x32xf32>, vector<2x32xf32> -> vector<2x32xf32>
    %76 = vector.broadcast %3 : vector<1x32xf32> to vector<2x32xf32>
    %77 = arith.addf %75, %76 : vector<2x32xf32>
    %78 = arith.index_cast %c2_i32 : i32 to index
    %c0_35 = arith.constant 0 : index
    %c0_36 = arith.constant 0 : index
    %79 = vector.load %arg0[%78, %c0_35, %c0_36] : memref<8x2x32xf32, #tpu.memory_space<vmem>>, vector<1x2x32xf32>
    %80 = vector.shape_cast %79 : vector<1x2x32xf32> to vector<2x32xf32>
    %81 = arith.addf %80, %73 : vector<2x32xf32>
    %82 = arith.negf %81 : vector<2x32xf32>
    %83 = math.exp %82 : vector<2x32xf32>
    %cst_37 = arith.constant 1.000000e+00 : f32
    %84 = vector.broadcast %cst_37 : f32 to vector<2x32xf32>
    %85 = arith.addf %84, %83 : vector<2x32xf32>
    %86 = arith.divf %84, %85 : vector<2x32xf32>
    %87 = arith.index_cast %c2_i32 : i32 to index
    %c0_38 = arith.constant 0 : index
    %c0_39 = arith.constant 0 : index
    %88 = vector.load %arg1[%87, %c0_38, %c0_39] : memref<8x2x32xf32, #tpu.memory_space<vmem>>, vector<1x2x32xf32>
    %89 = vector.shape_cast %88 : vector<1x2x32xf32> to vector<2x32xf32>
    %90 = arith.addf %89, %74 : vector<2x32xf32>
    %91 = arith.negf %90 : vector<2x32xf32>
    %92 = math.exp %91 : vector<2x32xf32>
    %cst_40 = arith.constant 1.000000e+00 : f32
    %93 = vector.broadcast %cst_40 : f32 to vector<2x32xf32>
    %94 = arith.addf %93, %92 : vector<2x32xf32>
    %95 = arith.divf %93, %94 : vector<2x32xf32>
    %96 = arith.index_cast %c2_i32 : i32 to index
    %c0_41 = arith.constant 0 : index
    %c0_42 = arith.constant 0 : index
    %97 = vector.load %arg2[%96, %c0_41, %c0_42] : memref<8x2x32xf32, #tpu.memory_space<vmem>>, vector<1x2x32xf32>
    %98 = vector.shape_cast %97 : vector<1x2x32xf32> to vector<2x32xf32>
    %99 = arith.mulf %86, %77 : vector<2x32xf32>
    %100 = arith.addf %98, %99 : vector<2x32xf32>
    %101 = math.tanh %100 : vector<2x32xf32>
    %cst_43 = arith.constant 1.000000e+00 : f32
    %102 = vector.broadcast %cst_43 : f32 to vector<2x32xf32>
    %103 = arith.subf %102, %95 : vector<2x32xf32>
    %104 = arith.mulf %103, %101 : vector<2x32xf32>
    %105 = arith.mulf %95, %72 : vector<2x32xf32>
    %106 = arith.addf %104, %105 : vector<2x32xf32>
    %c3_i32 = arith.constant 3 : i32
    %cst_44 = arith.constant dense<0.000000e+00> : vector<2x32xf32>
    %107 = tpu.matmul %106, %0, %cst_44 {dimension_numbers = #tpu.dot_dimension_numbers<[1], [0], [0], [1], [0, 0, 1, 1], [], []>} : vector<2x32xf32>, vector<32x32xf32>, vector<2x32xf32> -> vector<2x32xf32>
    %cst_45 = arith.constant dense<0.000000e+00> : vector<2x32xf32>
    %108 = tpu.matmul %106, %1, %cst_45 {dimension_numbers = #tpu.dot_dimension_numbers<[1], [0], [0], [1], [0, 0, 1, 1], [], []>} : vector<2x32xf32>, vector<32x32xf32>, vector<2x32xf32> -> vector<2x32xf32>
    %cst_46 = arith.constant dense<0.000000e+00> : vector<2x32xf32>
    %109 = tpu.matmul %106, %2, %cst_46 {dimension_numbers = #tpu.dot_dimension_numbers<[1], [0], [0], [1], [0, 0, 1, 1], [], []>} : vector<2x32xf32>, vector<32x32xf32>, vector<2x32xf32> -> vector<2x32xf32>
    %110 = vector.broadcast %3 : vector<1x32xf32> to vector<2x32xf32>
    %111 = arith.addf %109, %110 : vector<2x32xf32>
    %112 = arith.index_cast %c3_i32 : i32 to index
    %c0_47 = arith.constant 0 : index
    %c0_48 = arith.constant 0 : index
    %113 = vector.load %arg0[%112, %c0_47, %c0_48] : memref<8x2x32xf32, #tpu.memory_space<vmem>>, vector<1x2x32xf32>
    %114 = vector.shape_cast %113 : vector<1x2x32xf32> to vector<2x32xf32>
    %115 = arith.addf %114, %107 : vector<2x32xf32>
    %116 = arith.negf %115 : vector<2x32xf32>
    %117 = math.exp %116 : vector<2x32xf32>
    %cst_49 = arith.constant 1.000000e+00 : f32
    %118 = vector.broadcast %cst_49 : f32 to vector<2x32xf32>
    %119 = arith.addf %118, %117 : vector<2x32xf32>
    %120 = arith.divf %118, %119 : vector<2x32xf32>
    %121 = arith.index_cast %c3_i32 : i32 to index
    %c0_50 = arith.constant 0 : index
    %c0_51 = arith.constant 0 : index
    %122 = vector.load %arg1[%121, %c0_50, %c0_51] : memref<8x2x32xf32, #tpu.memory_space<vmem>>, vector<1x2x32xf32>
    %123 = vector.shape_cast %122 : vector<1x2x32xf32> to vector<2x32xf32>
    %124 = arith.addf %123, %108 : vector<2x32xf32>
    %125 = arith.negf %124 : vector<2x32xf32>
    %126 = math.exp %125 : vector<2x32xf32>
    %cst_52 = arith.constant 1.000000e+00 : f32
    %127 = vector.broadcast %cst_52 : f32 to vector<2x32xf32>
    %128 = arith.addf %127, %126 : vector<2x32xf32>
    %129 = arith.divf %127, %128 : vector<2x32xf32>
    %130 = arith.index_cast %c3_i32 : i32 to index
    %c0_53 = arith.constant 0 : index
    %c0_54 = arith.constant 0 : index
    %131 = vector.load %arg2[%130, %c0_53, %c0_54] : memref<8x2x32xf32, #tpu.memory_space<vmem>>, vector<1x2x32xf32>
    %132 = vector.shape_cast %131 : vector<1x2x32xf32> to vector<2x32xf32>
    %133 = arith.mulf %120, %111 : vector<2x32xf32>
    %134 = arith.addf %132, %133 : vector<2x32xf32>
    %135 = math.tanh %134 : vector<2x32xf32>
    %cst_55 = arith.constant 1.000000e+00 : f32
    %136 = vector.broadcast %cst_55 : f32 to vector<2x32xf32>
    %137 = arith.subf %136, %129 : vector<2x32xf32>
    %138 = arith.mulf %137, %135 : vector<2x32xf32>
    %139 = arith.mulf %129, %106 : vector<2x32xf32>
    %140 = arith.addf %138, %139 : vector<2x32xf32>
    %c4_i32 = arith.constant 4 : i32
    %cst_56 = arith.constant dense<0.000000e+00> : vector<2x32xf32>
    %141 = tpu.matmul %140, %0, %cst_56 {dimension_numbers = #tpu.dot_dimension_numbers<[1], [0], [0], [1], [0, 0, 1, 1], [], []>} : vector<2x32xf32>, vector<32x32xf32>, vector<2x32xf32> -> vector<2x32xf32>
    %cst_57 = arith.constant dense<0.000000e+00> : vector<2x32xf32>
    %142 = tpu.matmul %140, %1, %cst_57 {dimension_numbers = #tpu.dot_dimension_numbers<[1], [0], [0], [1], [0, 0, 1, 1], [], []>} : vector<2x32xf32>, vector<32x32xf32>, vector<2x32xf32> -> vector<2x32xf32>
    %cst_58 = arith.constant dense<0.000000e+00> : vector<2x32xf32>
    %143 = tpu.matmul %140, %2, %cst_58 {dimension_numbers = #tpu.dot_dimension_numbers<[1], [0], [0], [1], [0, 0, 1, 1], [], []>} : vector<2x32xf32>, vector<32x32xf32>, vector<2x32xf32> -> vector<2x32xf32>
    %144 = vector.broadcast %3 : vector<1x32xf32> to vector<2x32xf32>
    %145 = arith.addf %143, %144 : vector<2x32xf32>
    %146 = arith.index_cast %c4_i32 : i32 to index
    %c0_59 = arith.constant 0 : index
    %c0_60 = arith.constant 0 : index
    %147 = vector.load %arg0[%146, %c0_59, %c0_60] : memref<8x2x32xf32, #tpu.memory_space<vmem>>, vector<1x2x32xf32>
    %148 = vector.shape_cast %147 : vector<1x2x32xf32> to vector<2x32xf32>
    %149 = arith.addf %148, %141 : vector<2x32xf32>
    %150 = arith.negf %149 : vector<2x32xf32>
    %151 = math.exp %150 : vector<2x32xf32>
    %cst_61 = arith.constant 1.000000e+00 : f32
    %152 = vector.broadcast %cst_61 : f32 to vector<2x32xf32>
    %153 = arith.addf %152, %151 : vector<2x32xf32>
    %154 = arith.divf %152, %153 : vector<2x32xf32>
    %155 = arith.index_cast %c4_i32 : i32 to index
    %c0_62 = arith.constant 0 : index
    %c0_63 = arith.constant 0 : index
    %156 = vector.load %arg1[%155, %c0_62, %c0_63] : memref<8x2x32xf32, #tpu.memory_space<vmem>>, vector<1x2x32xf32>
    %157 = vector.shape_cast %156 : vector<1x2x32xf32> to vector<2x32xf32>
    %158 = arith.addf %157, %142 : vector<2x32xf32>
    %159 = arith.negf %158 : vector<2x32xf32>
    %160 = math.exp %159 : vector<2x32xf32>
    %cst_64 = arith.constant 1.000000e+00 : f32
    %161 = vector.broadcast %cst_64 : f32 to vector<2x32xf32>
    %162 = arith.addf %161, %160 : vector<2x32xf32>
    %163 = arith.divf %161, %162 : vector<2x32xf32>
    %164 = arith.index_cast %c4_i32 : i32 to index
    %c0_65 = arith.constant 0 : index
    %c0_66 = arith.constant 0 : index
    %165 = vector.load %arg2[%164, %c0_65, %c0_66] : memref<8x2x32xf32, #tpu.memory_space<vmem>>, vector<1x2x32xf32>
    %166 = vector.shape_cast %165 : vector<1x2x32xf32> to vector<2x32xf32>
    %167 = arith.mulf %154, %145 : vector<2x32xf32>
    %168 = arith.addf %166, %167 : vector<2x32xf32>
    %169 = math.tanh %168 : vector<2x32xf32>
    %cst_67 = arith.constant 1.000000e+00 : f32
    %170 = vector.broadcast %cst_67 : f32 to vector<2x32xf32>
    %171 = arith.subf %170, %163 : vector<2x32xf32>
    %172 = arith.mulf %171, %169 : vector<2x32xf32>
    %173 = arith.mulf %163, %140 : vector<2x32xf32>
    %174 = arith.addf %172, %173 : vector<2x32xf32>
    %c5_i32 = arith.constant 5 : i32
    %cst_68 = arith.constant dense<0.000000e+00> : vector<2x32xf32>
    %175 = tpu.matmul %174, %0, %cst_68 {dimension_numbers = #tpu.dot_dimension_numbers<[1], [0], [0], [1], [0, 0, 1, 1], [], []>} : vector<2x32xf32>, vector<32x32xf32>, vector<2x32xf32> -> vector<2x32xf32>
    %cst_69 = arith.constant dense<0.000000e+00> : vector<2x32xf32>
    %176 = tpu.matmul %174, %1, %cst_69 {dimension_numbers = #tpu.dot_dimension_numbers<[1], [0], [0], [1], [0, 0, 1, 1], [], []>} : vector<2x32xf32>, vector<32x32xf32>, vector<2x32xf32> -> vector<2x32xf32>
    %cst_70 = arith.constant dense<0.000000e+00> : vector<2x32xf32>
    %177 = tpu.matmul %174, %2, %cst_70 {dimension_numbers = #tpu.dot_dimension_numbers<[1], [0], [0], [1], [0, 0, 1, 1], [], []>} : vector<2x32xf32>, vector<32x32xf32>, vector<2x32xf32> -> vector<2x32xf32>
    %178 = vector.broadcast %3 : vector<1x32xf32> to vector<2x32xf32>
    %179 = arith.addf %177, %178 : vector<2x32xf32>
    %180 = arith.index_cast %c5_i32 : i32 to index
    %c0_71 = arith.constant 0 : index
    %c0_72 = arith.constant 0 : index
    %181 = vector.load %arg0[%180, %c0_71, %c0_72] : memref<8x2x32xf32, #tpu.memory_space<vmem>>, vector<1x2x32xf32>
    %182 = vector.shape_cast %181 : vector<1x2x32xf32> to vector<2x32xf32>
    %183 = arith.addf %182, %175 : vector<2x32xf32>
    %184 = arith.negf %183 : vector<2x32xf32>
    %185 = math.exp %184 : vector<2x32xf32>
    %cst_73 = arith.constant 1.000000e+00 : f32
    %186 = vector.broadcast %cst_73 : f32 to vector<2x32xf32>
    %187 = arith.addf %186, %185 : vector<2x32xf32>
    %188 = arith.divf %186, %187 : vector<2x32xf32>
    %189 = arith.index_cast %c5_i32 : i32 to index
    %c0_74 = arith.constant 0 : index
    %c0_75 = arith.constant 0 : index
    %190 = vector.load %arg1[%189, %c0_74, %c0_75] : memref<8x2x32xf32, #tpu.memory_space<vmem>>, vector<1x2x32xf32>
    %191 = vector.shape_cast %190 : vector<1x2x32xf32> to vector<2x32xf32>
    %192 = arith.addf %191, %176 : vector<2x32xf32>
    %193 = arith.negf %192 : vector<2x32xf32>
    %194 = math.exp %193 : vector<2x32xf32>
    %cst_76 = arith.constant 1.000000e+00 : f32
    %195 = vector.broadcast %cst_76 : f32 to vector<2x32xf32>
    %196 = arith.addf %195, %194 : vector<2x32xf32>
    %197 = arith.divf %195, %196 : vector<2x32xf32>
    %198 = arith.index_cast %c5_i32 : i32 to index
    %c0_77 = arith.constant 0 : index
    %c0_78 = arith.constant 0 : index
    %199 = vector.load %arg2[%198, %c0_77, %c0_78] : memref<8x2x32xf32, #tpu.memory_space<vmem>>, vector<1x2x32xf32>
    %200 = vector.shape_cast %199 : vector<1x2x32xf32> to vector<2x32xf32>
    %201 = arith.mulf %188, %179 : vector<2x32xf32>
    %202 = arith.addf %200, %201 : vector<2x32xf32>
    %203 = math.tanh %202 : vector<2x32xf32>
    %cst_79 = arith.constant 1.000000e+00 : f32
    %204 = vector.broadcast %cst_79 : f32 to vector<2x32xf32>
    %205 = arith.subf %204, %197 : vector<2x32xf32>
    %206 = arith.mulf %205, %203 : vector<2x32xf32>
    %207 = arith.mulf %197, %174 : vector<2x32xf32>
    %208 = arith.addf %206, %207 : vector<2x32xf32>
    %c6_i32 = arith.constant 6 : i32
    %cst_80 = arith.constant dense<0.000000e+00> : vector<2x32xf32>
    %209 = tpu.matmul %208, %0, %cst_80 {dimension_numbers = #tpu.dot_dimension_numbers<[1], [0], [0], [1], [0, 0, 1, 1], [], []>} : vector<2x32xf32>, vector<32x32xf32>, vector<2x32xf32> -> vector<2x32xf32>
    %cst_81 = arith.constant dense<0.000000e+00> : vector<2x32xf32>
    %210 = tpu.matmul %208, %1, %cst_81 {dimension_numbers = #tpu.dot_dimension_numbers<[1], [0], [0], [1], [0, 0, 1, 1], [], []>} : vector<2x32xf32>, vector<32x32xf32>, vector<2x32xf32> -> vector<2x32xf32>
    %cst_82 = arith.constant dense<0.000000e+00> : vector<2x32xf32>
    %211 = tpu.matmul %208, %2, %cst_82 {dimension_numbers = #tpu.dot_dimension_numbers<[1], [0], [0], [1], [0, 0, 1, 1], [], []>} : vector<2x32xf32>, vector<32x32xf32>, vector<2x32xf32> -> vector<2x32xf32>
    %212 = vector.broadcast %3 : vector<1x32xf32> to vector<2x32xf32>
    %213 = arith.addf %211, %212 : vector<2x32xf32>
    %214 = arith.index_cast %c6_i32 : i32 to index
    %c0_83 = arith.constant 0 : index
    %c0_84 = arith.constant 0 : index
    %215 = vector.load %arg0[%214, %c0_83, %c0_84] : memref<8x2x32xf32, #tpu.memory_space<vmem>>, vector<1x2x32xf32>
    %216 = vector.shape_cast %215 : vector<1x2x32xf32> to vector<2x32xf32>
    %217 = arith.addf %216, %209 : vector<2x32xf32>
    %218 = arith.negf %217 : vector<2x32xf32>
    %219 = math.exp %218 : vector<2x32xf32>
    %cst_85 = arith.constant 1.000000e+00 : f32
    %220 = vector.broadcast %cst_85 : f32 to vector<2x32xf32>
    %221 = arith.addf %220, %219 : vector<2x32xf32>
    %222 = arith.divf %220, %221 : vector<2x32xf32>
    %223 = arith.index_cast %c6_i32 : i32 to index
    %c0_86 = arith.constant 0 : index
    %c0_87 = arith.constant 0 : index
    %224 = vector.load %arg1[%223, %c0_86, %c0_87] : memref<8x2x32xf32, #tpu.memory_space<vmem>>, vector<1x2x32xf32>
    %225 = vector.shape_cast %224 : vector<1x2x32xf32> to vector<2x32xf32>
    %226 = arith.addf %225, %210 : vector<2x32xf32>
    %227 = arith.negf %226 : vector<2x32xf32>
    %228 = math.exp %227 : vector<2x32xf32>
    %cst_88 = arith.constant 1.000000e+00 : f32
    %229 = vector.broadcast %cst_88 : f32 to vector<2x32xf32>
    %230 = arith.addf %229, %228 : vector<2x32xf32>
    %231 = arith.divf %229, %230 : vector<2x32xf32>
    %232 = arith.index_cast %c6_i32 : i32 to index
    %c0_89 = arith.constant 0 : index
    %c0_90 = arith.constant 0 : index
    %233 = vector.load %arg2[%232, %c0_89, %c0_90] : memref<8x2x32xf32, #tpu.memory_space<vmem>>, vector<1x2x32xf32>
    %234 = vector.shape_cast %233 : vector<1x2x32xf32> to vector<2x32xf32>
    %235 = arith.mulf %222, %213 : vector<2x32xf32>
    %236 = arith.addf %234, %235 : vector<2x32xf32>
    %237 = math.tanh %236 : vector<2x32xf32>
    %cst_91 = arith.constant 1.000000e+00 : f32
    %238 = vector.broadcast %cst_91 : f32 to vector<2x32xf32>
    %239 = arith.subf %238, %231 : vector<2x32xf32>
    %240 = arith.mulf %239, %237 : vector<2x32xf32>
    %241 = arith.mulf %231, %208 : vector<2x32xf32>
    %242 = arith.addf %240, %241 : vector<2x32xf32>
    %c7_i32 = arith.constant 7 : i32
    %cst_92 = arith.constant dense<0.000000e+00> : vector<2x32xf32>
    %243 = tpu.matmul %242, %0, %cst_92 {dimension_numbers = #tpu.dot_dimension_numbers<[1], [0], [0], [1], [0, 0, 1, 1], [], []>} : vector<2x32xf32>, vector<32x32xf32>, vector<2x32xf32> -> vector<2x32xf32>
    %cst_93 = arith.constant dense<0.000000e+00> : vector<2x32xf32>
    %244 = tpu.matmul %242, %1, %cst_93 {dimension_numbers = #tpu.dot_dimension_numbers<[1], [0], [0], [1], [0, 0, 1, 1], [], []>} : vector<2x32xf32>, vector<32x32xf32>, vector<2x32xf32> -> vector<2x32xf32>
    %cst_94 = arith.constant dense<0.000000e+00> : vector<2x32xf32>
    %245 = tpu.matmul %242, %2, %cst_94 {dimension_numbers = #tpu.dot_dimension_numbers<[1], [0], [0], [1], [0, 0, 1, 1], [], []>} : vector<2x32xf32>, vector<32x32xf32>, vector<2x32xf32> -> vector<2x32xf32>
    %246 = vector.broadcast %3 : vector<1x32xf32> to vector<2x32xf32>
    %247 = arith.addf %245, %246 : vector<2x32xf32>
    %248 = arith.index_cast %c7_i32 : i32 to index
    %c0_95 = arith.constant 0 : index
    %c0_96 = arith.constant 0 : index
    %249 = vector.load %arg0[%248, %c0_95, %c0_96] : memref<8x2x32xf32, #tpu.memory_space<vmem>>, vector<1x2x32xf32>
    %250 = vector.shape_cast %249 : vector<1x2x32xf32> to vector<2x32xf32>
    %251 = arith.addf %250, %243 : vector<2x32xf32>
    %252 = arith.negf %251 : vector<2x32xf32>
    %253 = math.exp %252 : vector<2x32xf32>
    %cst_97 = arith.constant 1.000000e+00 : f32
    %254 = vector.broadcast %cst_97 : f32 to vector<2x32xf32>
    %255 = arith.addf %254, %253 : vector<2x32xf32>
    %256 = arith.divf %254, %255 : vector<2x32xf32>
    %257 = arith.index_cast %c7_i32 : i32 to index
    %c0_98 = arith.constant 0 : index
    %c0_99 = arith.constant 0 : index
    %258 = vector.load %arg1[%257, %c0_98, %c0_99] : memref<8x2x32xf32, #tpu.memory_space<vmem>>, vector<1x2x32xf32>
    %259 = vector.shape_cast %258 : vector<1x2x32xf32> to vector<2x32xf32>
    %260 = arith.addf %259, %244 : vector<2x32xf32>
    %261 = arith.negf %260 : vector<2x32xf32>
    %262 = math.exp %261 : vector<2x32xf32>
    %cst_100 = arith.constant 1.000000e+00 : f32
    %263 = vector.broadcast %cst_100 : f32 to vector<2x32xf32>
    %264 = arith.addf %263, %262 : vector<2x32xf32>
    %265 = arith.divf %263, %264 : vector<2x32xf32>
    %266 = arith.index_cast %c7_i32 : i32 to index
    %c0_101 = arith.constant 0 : index
    %c0_102 = arith.constant 0 : index
    %267 = vector.load %arg2[%266, %c0_101, %c0_102] : memref<8x2x32xf32, #tpu.memory_space<vmem>>, vector<1x2x32xf32>
    %268 = vector.shape_cast %267 : vector<1x2x32xf32> to vector<2x32xf32>
    %269 = arith.mulf %256, %247 : vector<2x32xf32>
    %270 = arith.addf %268, %269 : vector<2x32xf32>
    %271 = math.tanh %270 : vector<2x32xf32>
    %cst_103 = arith.constant 1.000000e+00 : f32
    %272 = vector.broadcast %cst_103 : f32 to vector<2x32xf32>
    %273 = arith.subf %272, %265 : vector<2x32xf32>
    %274 = arith.mulf %273, %271 : vector<2x32xf32>
    %275 = arith.mulf %265, %242 : vector<2x32xf32>
    %276 = arith.addf %274, %275 : vector<2x32xf32>
    %c8_i32 = arith.constant 8 : i32
    %c0_104 = arith.constant 0 : index
    %c0_105 = arith.constant 0 : index
    %277 = vector.load %arg9[%c0_104, %c0_105] : memref<2x32xf32, #tpu.memory_space<vmem>>, vector<2x32xf32>
    tpu.vector_store %arg9[%c0_104, %c0_105], %276 {strides = array<i32>} : memref<2x32xf32, #tpu.memory_space<vmem>>, vector<2x32xf32>,
    %cst_106 = arith.constant 0.000000e+00 : f32
    %278 = vector.broadcast %cst_106 : f32 to vector<2x32xf32>
    %279 = arith.maximumf %276, %278 : vector<2x32xf32>
    %c0_107 = arith.constant 0 : index
    %c0_108 = arith.constant 0 : index
    %280 = vector.load %arg8[%c0_107, %c0_108] : memref<2x32xf32, #tpu.memory_space<vmem>>, vector<2x32xf32>
    tpu.vector_store %arg8[%c0_107, %c0_108], %279 {strides = array<i32>} : memref<2x32xf32, #tpu.memory_space<vmem>>, vector<2x32xf32>,
    return
  }
}

</mosaic_0001>

<llo_original>
// kernel: tpu_custom_call.1
$region0: #{tpu_custom_call.1}
  #allocation0 [shape = 'u32[]', space=smem, size = 0x4, offset = 0x4, fixed_abs, tag = 'smem constant byte address 0x4 - core index']
  #allocation1 [shape = 'u32[144,128]{1,0:T(1,128)}', space=vmem, size = 0x12000, scoped, tag = 'internal scratch']
  %s0 = inlined_call_operand.hbm [shape: f32[8,2,32], index: 0, kind: input, shape index: {}]
  %s1 = inlined_call_operand.hbm [shape: f32[8,2,32], index: 1, kind: input, shape index: {}]
  %s2 = inlined_call_operand.hbm [shape: f32[8,2,32], index: 2, kind: input, shape index: {}]
  %s3 = inlined_call_operand.hbm [shape: f32[32,32], index: 3, kind: input, shape index: {}]
  %s4 = inlined_call_operand.hbm [shape: f32[32,32], index: 4, kind: input, shape index: {}]
  %s5 = inlined_call_operand.hbm [shape: f32[32,32], index: 5, kind: input, shape index: {}]
  %s6 = inlined_call_operand.vmem [shape: f32[1,32], index: 6, kind: input, shape index: {}]
  %s7 = inlined_call_operand.vmem [shape: f32[2,32], index: 7, kind: input, shape index: {}]
  %s8 = inlined_call_operand.hbm [shape: f32[2,32], index: 8, kind: output, shape index: {0}]
  %s9 = inlined_call_operand.hbm [shape: f32[2,32], index: 9, kind: output, shape index: {1}]
  %10 = xla_tuple %s8, %s9
  %s11 = sld [smem:[#allocation0]]
  $region74: #{tpu_custom_call.1} parent=0
    _
  %s13 = ssub.s32 1, %s11
  %s14 = scalar_select 0, %s13, %s11
  $region1: #{tpu_custom_call.1} parent=0
    #allocation2 [shape = 'u8[8192]{0}', space=vmem, size = 0x2000, scoped, tag = 'input window, operand 0, single buffered']
    #allocation3 [shape = 's32[1]{0}', space=sflag, size = 0x4, scoped, tag = 'scoped memory for tpu_custom_call.1']
    #allocation4 [shape = 's32[1]{0}', space=sflag, size = 0x4, scoped, tag = 'scoped memory for tpu_custom_call.1']
    #allocation5 [shape = 'u8[8192]{0}', space=vmem, size = 0x2000, scoped, tag = 'input window, operand 1, single buffered']
    #allocation6 [shape = 's32[1]{0}', space=sflag, size = 0x4, scoped, tag = 'scoped memory for tpu_custom_call.1']
    #allocation7 [shape = 'u8[8192]{0}', space=vmem, size = 0x2000, scoped, tag = 'input window, operand 2, single buffered']
    #allocation8 [shape = 'u8[16384]{0}', space=vmem, size = 0x4000, scoped, tag = 'input window, operand 3, single buffered']
    #allocation9 [shape = 's32[1]{0}', space=sflag, size = 0x4, scoped, tag = 'scoped memory for tpu_custom_call.1']
    #allocation10 [shape = 'u8[16384]{0}', space=vmem, size = 0x4000, scoped, tag = 'input window, operand 4, single buffered']
    #allocation11 [shape = 'u8[16384]{0}', space=vmem, size = 0x4000, scoped, tag = 'input window, operand 5, single buffered']
    #allocation12 [shape = 's32[1]{0}', space=sflag, size = 0x4, scoped, tag = 'scoped memory for tpu_custom_call.1']
    #allocation13 [shape = 'u8[1024]{0}', space=vmem, size = 0x400, scoped, tag = 'output window, operand 0, single buffered']
    #allocation14 [shape = 'u8[1024]{0}', space=vmem, size = 0x400, scoped, tag = 'output window, operand 1, single buffered']
    #allocation15 [shape = 's32[1]{0}', space=sflag, size = 0x4, scoped, tag = 'scoped memory for tpu_custom_call.1']
    %15 = vsyncpa [#allocation3], 0
    %16 = vsyncpa [#allocation6], 0
    %17 = vsyncpa [#allocation9], 0
    %18 = vsyncpa [#allocation12], 0
    %19 = vsyncpa [#allocation4], 0
    %20 = vsyncpa [#allocation15], 0
    // Predicated region
    $region2: #{tpu_custom_call.1} parent=1 // pred_check
      _
    $region3: #{tpu_custom_call.1} parent=1 // pred_check_branch
      %22 = sbr.rel (0) target = $region5
    $region4: #{tpu_custom_call.1} parent=1 // pred_region
      %s24 = ssub.s32 256, 256
      %25 = vsyncadd [#allocation3], %s24
      %s26 = sshll.u32 [#allocation2], 4
      %s27 = int_to_ptr.vmem [resolvable:$true] %s26
      %32 = dma.hbm_to_vmem [thread:$0]  %s0, 256, %s27, [#allocation3], 32, 32, 2
    $region5: #{tpu_custom_call.1} parent=1 // pred_fallthru
      _
    // Predicated region
    $region6: #{tpu_custom_call.1} parent=1 // pred_check
      _
    $region7: #{tpu_custom_call.1} parent=1 // pred_check_branch
      %34 = sbr.rel (0) target = $region9
    $region8: #{tpu_custom_call.1} parent=1 // pred_region
      %s36 = ssub.s32 256, 256
      %37 = vsyncadd [#allocation6], %s36
      %s38 = sshll.u32 [#allocation5], 4
      %s39 = int_to_ptr.vmem [resolvable:$true] %s38
      %44 = dma.hbm_to_vmem [thread:$0]  %s1, 256, %s39, [#allocation6], 32, 32, 2
    $region9: #{tpu_custom_call.1} parent=1 // pred_fallthru
      _
    // Predicated region
    $region10: #{tpu_custom_call.1} parent=1 // pred_check
      _
    $region11: #{tpu_custom_call.1} parent=1 // pred_check_branch
      %46 = sbr.rel (0) target = $region13
    $region12: #{tpu_custom_call.1} parent=1 // pred_region
      %s48 = ssub.s32 256, 256
      %49 = vsyncadd [#allocation6], %s48
      %s50 = sshll.u32 [#allocation7], 4
      %s51 = int_to_ptr.vmem [resolvable:$true] %s50
      %56 = dma.hbm_to_vmem [thread:$0]  %s2, 256, %s51, [#allocation6], 32, 32, 2
    $region13: #{tpu_custom_call.1} parent=1 // pred_fallthru
      _
    // Predicated region
    $region14: #{tpu_custom_call.1} parent=1 // pred_check
      _
    $region15: #{tpu_custom_call.1} parent=1 // pred_check_branch
      %58 = sbr.rel (0) target = $region17
    $region16: #{tpu_custom_call.1} parent=1 // pred_region
      %s60 = ssub.s32 512, 512
      %61 = vsyncadd [#allocation9], %s60
      %s62 = sshll.u32 [#allocation8], 4
      %s63 = int_to_ptr.vmem [resolvable:$true] %s62
      %68 = dma.hbm_to_vmem [thread:$0]  %s3, 512, %s63, [#allocation9], 128, 128, 8
    $region17: #{tpu_custom_call.1} parent=1 // pred_fallthru
      _
    // Predicated region
    $region18: #{tpu_custom_call.1} parent=1 // pred_check
      _
    $region19: #{tpu_custom_call.1} parent=1 // pred_check_branch
      %70 = sbr.rel (0) target = $region21
    $region20: #{tpu_custom_call.1} parent=1 // pred_region
      %s72 = ssub.s32 512, 512
      %73 = vsyncadd [#allocation9], %s72
      %s74 = sshll.u32 [#allocation10], 4
      %s75 = int_to_ptr.vmem [resolvable:$true] %s74
      %80 = dma.hbm_to_vmem [thread:$0]  %s4, 512, %s75, [#allocation9], 128, 128, 8
    $region21: #{tpu_custom_call.1} parent=1 // pred_fallthru
      _
    // Predicated region
    $region22: #{tpu_custom_call.1} parent=1 // pred_check
      _
    $region23: #{tpu_custom_call.1} parent=1 // pred_check_branch
      %82 = sbr.rel (0) target = $region25
    $region24: #{tpu_custom_call.1} parent=1 // pred_region
      %s84 = ssub.s32 512, 512
      %85 = vsyncadd [#allocation12], %s84
      %s86 = sshll.u32 [#allocation11], 4
      %s87 = int_to_ptr.vmem [resolvable:$true] %s86
      %92 = dma.hbm_to_vmem [thread:$0]  %s5, 512, %s87, [#allocation12], 128, 128, 8
    $region25: #{tpu_custom_call.1} parent=1 // pred_fallthru
      _
    // Predicated region
    $region26: #{tpu_custom_call.1} parent=1 // pred_check
      _
    $region27: #{tpu_custom_call.1} parent=1 // pred_check_branch
      %94 = sbr.rel (0) target = $region29
    $region28: #{tpu_custom_call.1} parent=1 // pred_region
      _
    $region29: #{tpu_custom_call.1} parent=1 // pred_fallthru
      _
    // Predicated region
    $region30: #{tpu_custom_call.1} parent=1 // pred_check
      _
    $region31: #{tpu_custom_call.1} parent=1 // pred_check_branch
      %96 = sbr.rel (0) target = $region33
    $region32: #{tpu_custom_call.1} parent=1 // pred_region
      _
    $region33: #{tpu_custom_call.1} parent=1 // pred_fallthru
      _
    // Predicated region
    $region34: #{tpu_custom_call.1} parent=1 // pred_check
      _
    $region35: #{tpu_custom_call.1} parent=1 // pred_check_branch
      %98 = sbr.rel (0) target = $region37
    $region36: #{tpu_custom_call.1} parent=1 // pred_region
      %99 = dma.done [#allocation3], 256
    $region37: #{tpu_custom_call.1} parent=1 // pred_fallthru
      _
    // Predicated region
    $region38: #{tpu_custom_call.1} parent=1 // pred_check
      _
    $region39: #{tpu_custom_call.1} parent=1 // pred_check_branch
      %101 = sbr.rel (0) target = $region41
    $region40: #{tpu_custom_call.1} parent=1 // pred_region
      %102 = dma.done [#allocation6], 256
    $region41: #{tpu_custom_call.1} parent=1 // pred_fallthru
      _
    // Predicated region
    $region42: #{tpu_custom_call.1} parent=1 // pred_check
      _
    $region43: #{tpu_custom_call.1} parent=1 // pred_check_branch
      %104 = sbr.rel (0) target = $region45
    $region44: #{tpu_custom_call.1} parent=1 // pred_region
      %105 = dma.done [#allocation6], 256
    $region45: #{tpu_custom_call.1} parent=1 // pred_fallthru
      _
    // Predicated region
    $region46: #{tpu_custom_call.1} parent=1 // pred_check
      _
    $region47: #{tpu_custom_call.1} parent=1 // pred_check_branch
      %107 = sbr.rel (0) target = $region49
    $region48: #{tpu_custom_call.1} parent=1 // pred_region
      %108 = dma.done [#allocation9], 512
    $region49: #{tpu_custom_call.1} parent=1 // pred_fallthru
      _
    // Predicated region
    $region50: #{tpu_custom_call.1} parent=1 // pred_check
      _
    $region51: #{tpu_custom_call.1} parent=1 // pred_check_branch
      %110 = sbr.rel (0) target = $region53
    $region52: #{tpu_custom_call.1} parent=1 // pred_region
      %111 = dma.done [#allocation9], 512
    $region53: #{tpu_custom_call.1} parent=1 // pred_fallthru
      _
    // Predicated region
    $region54: #{tpu_custom_call.1} parent=1 // pred_check
      _
    $region55: #{tpu_custom_call.1} parent=1 // pred_check_branch
      %113 = sbr.rel (0) target = $region57
    $region56: #{tpu_custom_call.1} parent=1 // pred_region
      %114 = dma.done [#allocation12], 512
    $region57: #{tpu_custom_call.1} parent=1 // pred_fallthru
      _
    %v115 = vld [vmem:[#allocation8] sm:$0xff]
    %v116 = vld [vmem:[#allocation8 + $0x8] sm:$0xff]
    %v117 = vld [vmem:[#allocation8 + $0x10] sm:$0xff]
    %v118 = vld [vmem:[#allocation8 + $0x18] sm:$0xff]
    %v119 = vld [vmem:[#allocation10] sm:$0xff]
    %v120 = vld [vmem:[#allocation10 + $0x8] sm:$0xff]
    %v121 = vld [vmem:[#allocation10 + $0x10] sm:$0xff]
    %v122 = vld [vmem:[#allocation10 + $0x18] sm:$0xff]
    %v123 = vld [vmem:[#allocation11] sm:$0xff]
    %v124 = vld [vmem:[#allocation11 + $0x8] sm:$0xff]
    %v125 = vld [vmem:[#allocation11 + $0x10] sm:$0xff]
    %v126 = vld [vmem:[#allocation11 + $0x18] sm:$0xff]
    %v127 = vld [vmem:[%s6] sm:$0x1]
    %v128 = vld [vmem:[%s7] sm:$0x3]
    %vm129 = vcmask 261120
    %v131 = vsel %vm129, %v128, 0
    %133 = vmatprep.subr.mxu0 0.0
    %134 = vmatpush1.msra.mxu0 %v115
    %135 = vmatprep.subr.mxu0 0.0
    %136 = vmatpush1.msra.mxu0 %v116
    %137 = vmatprep.subr.mxu0 0.0
    %138 = vmatpush1.msra.mxu0 %v117
    %139 = vmatprep.subr.mxu0 0.0
    %140 = vmatpush1.msra.mxu0 %v118
    %141 = vmatprep.subr.mxu0 0.0
    %142 = vmatpush1.msra.mxu0 0.0
    %143 = vmatprep.subr.mxu0 0.0
    %144 = vmatpush1.msra.mxu0 0.0
    %145 = vmatprep.subr.mxu0 0.0
    %146 = vmatpush1.msra.mxu0 0.0
    %147 = vmatprep.subr.mxu0 0.0
    %148 = vmatpush1.msra.mxu0 0.0
    %149 = vmatprep.subr.mxu0 0.0
    %150 = vmatpush1.msra.mxu0 0.0
    %151 = vmatprep.subr.mxu0 0.0
    %152 = vmatpush1.msra.mxu0 0.0
    %153 = vmatprep.subr.mxu0 0.0
    %154 = vmatpush1.msra.mxu0 0.0
    %155 = vmatprep.subr.mxu0 0.0
    %156 = vmatpush1.msra.mxu0 0.0
    %157 = vmatprep.subr.mxu0 0.0
    %158 = vmatpush1.msra.mxu0 0.0
    %159 = vmatprep.subr.mxu0 0.0
    %160 = vmatpush1.msra.mxu0 0.0
    %161 = vmatprep.subr.mxu0 0.0
    %162 = vmatpush1.msra.mxu0 0.0
    %163 = vmatprep.subr.mxu0 0.0
    %164 = vmatpush1.msra.mxu0 0.0
    %165 = vmatprep.subr.mxu0 0.0
    %166 = vmatpush1.msra.mxu0 0.0
    %167 = vmatprep.subr.mxu0 0.0
    %168 = vmatpush1.msra.mxu0 0.0
    %169 = vmatprep.subr.mxu0 0.0
    %170 = vmatpush1.msra.mxu0 0.0
    %171 = vmatprep.subr.mxu0 0.0
    %172 = vmatpush1.msra.mxu0 0.0
    %173 = vmatprep.subr.mxu0 0.0
    %174 = vmatpush1.msra.mxu0 0.0
    %175 = vmatprep.subr.mxu0 0.0
    %176 = vmatpush1.msra.mxu0 0.0
    %177 = vmatprep.subr.mxu0 0.0
    %178 = vmatpush1.msra.mxu0 0.0
    %179 = vmatprep.subr.mxu0 0.0
    %180 = vmatpush1.msra.mxu0 0.0
    %181 = vmatprep.subr.mxu0 0.0
    %182 = vmatpush1.msra.mxu0 0.0
    %183 = vmatprep.subr.mxu0 0.0
    %184 = vmatpush1.msra.mxu0 0.0
    %185 = vmatprep.subr.mxu0 0.0
    %186 = vmatpush1.msra.mxu0 0.0
    %187 = vmatprep.subr.mxu0 0.0
    %188 = vmatpush1.msra.mxu0 0.0
    %189 = vmatprep.subr.mxu0 0.0
    %190 = vmatpush1.msra.mxu0 0.0
    %191 = vmatprep.subr.mxu0 0.0
    %192 = vmatpush1.msra.mxu0 0.0
    %193 = vmatprep.subr.mxu0 0.0
    %194 = vmatpush1.msra.mxu0 0.0
    %195 = vmatprep.subr.mxu0 0.0
    %196 = vmatpush1.msra.mxu0 0.0
    %197 = vmatprep.mubr.f32.mxu0 0.0
    %198 = vmatmul.mubr.f32.gmra.mrb[0].mxu0 %v131
    %v199 = vpop.f32.mrb[0].mxu0
    %v200 = vadd.f32 0.0, %v199
    %v201 = vpop.f32.mrb[0].mxu0
    %202 = vdwg.mxu0
    %203 = vmatprep.subr.mxu0 0.0
    %204 = vmatpush1.msra.mxu0 %v119
    %205 = vmatprep.subr.mxu0 0.0
    %206 = vmatpush1.msra.mxu0 %v120
    %207 = vmatprep.subr.mxu0 0.0
    %208 = vmatpush1.msra.mxu0 %v121
    %209 = vmatprep.subr.mxu0 0.0
    %210 = vmatpush1.msra.mxu0 %v122
    %211 = vmatprep.subr.mxu0 0.0
    %212 = vmatpush1.msra.mxu0 0.0
    %213 = vmatprep.subr.mxu0 0.0
    %214 = vmatpush1.msra.mxu0 0.0
    %215 = vmatprep.subr.mxu0 0.0
    %216 = vmatpush1.msra.mxu0 0.0
    %217 = vmatprep.subr.mxu0 0.0
    %218 = vmatpush1.msra.mxu0 0.0
    %219 = vmatprep.subr.mxu0 0.0
    %220 = vmatpush1.msra.mxu0 0.0
    %221 = vmatprep.subr.mxu0 0.0
    %222 = vmatpush1.msra.mxu0 0.0
    %223 = vmatprep.subr.mxu0 0.0
    %224 = vmatpush1.msra.mxu0 0.0
    %225 = vmatprep.subr.mxu0 0.0
    %226 = vmatpush1.msra.mxu0 0.0
    %227 = vmatprep.subr.mxu0 0.0
    %228 = vmatpush1.msra.mxu0 0.0
    %229 = vmatprep.subr.mxu0 0.0
    %230 = vmatpush1.msra.mxu0 0.0
    %231 = vmatprep.subr.mxu0 0.0
    %232 = vmatpush1.msra.mxu0 0.0
    %233 = vmatprep.subr.mxu0 0.0
    %234 = vmatpush1.msra.mxu0 0.0
    %235 = vmatprep.subr.mxu0 0.0
    %236 = vmatpush1.msra.mxu0 0.0
    %237 = vmatprep.subr.mxu0 0.0
    %238 = vmatpush1.msra.mxu0 0.0
    %239 = vmatprep.subr.mxu0 0.0
    %240 = vmatpush1.msra.mxu0 0.0
    %241 = vmatprep.subr.mxu0 0.0
    %242 = vmatpush1.msra.mxu0 0.0
    %243 = vmatprep.subr.mxu0 0.0
    %244 = vmatpush1.msra.mxu0 0.0
    %245 = vmatprep.subr.mxu0 0.0
    %246 = vmatpush1.msra.mxu0 0.0
    %247 = vmatprep.subr.mxu0 0.0
    %248 = vmatpush1.msra.mxu0 0.0
    %249 = vmatprep.subr.mxu0 0.0
    %250 = vmatpush1.msra.mxu0 0.0
    %251 = vmatprep.subr.mxu0 0.0
    %252 = vmatpush1.msra.mxu0 0.0
    %253 = vmatprep.subr.mxu0 0.0
    %254 = vmatpush1.msra.mxu0 0.0
    %255 = vmatprep.subr.mxu0 0.0
    %256 = vmatpush1.msra.mxu0 0.0
    %257 = vmatprep.subr.mxu0 0.0
    %258 = vmatpush1.msra.mxu0 0.0
    %259 = vmatprep.subr.mxu0 0.0
    %260 = vmatpush1.msra.mxu0 0.0
    %261 = vmatprep.subr.mxu0 0.0
    %262 = vmatpush1.msra.mxu0 0.0
    %263 = vmatprep.subr.mxu0 0.0
    %264 = vmatpush1.msra.mxu0 0.0
    %265 = vmatprep.subr.mxu0 0.0
    %266 = vmatpush1.msra.mxu0 0.0
    %267 = vmatprep.mubr.f32.mxu0 0.0
    %268 = vmatmul.mubr.f32.gmra.mrb[0].mxu0 %v131
    %v269 = vpop.f32.mrb[0].mxu0
    %v270 = vadd.f32 0.0, %v269
    %v271 = vpop.f32.mrb[0].mxu0
    %272 = vdwg.mxu0
    %v274 = vlaneseq
    %v275 = vshrl.u32 %v274, 7
    %v276 = vsub.s32 0, %v275
    %v277 = vrot.slane %v127, %v276
    %279 = vmatprep.subr.mxu0 0.0
    %280 = vmatpush1.msra.mxu0 %v123
    %281 = vmatprep.subr.mxu0 0.0
    %282 = vmatpush1.msra.mxu0 %v124
    %283 = vmatprep.subr.mxu0 0.0
    %284 = vmatpush1.msra.mxu0 %v125
    %285 = vmatprep.subr.mxu0 0.0
    %286 = vmatpush1.msra.mxu0 %v126
    %287 = vmatprep.subr.mxu0 0.0
    %288 = vmatpush1.msra.mxu0 0.0
    %289 = vmatprep.subr.mxu0 0.0
    %290 = vmatpush1.msra.mxu0 0.0
    %291 = vmatprep.subr.mxu0 0.0
    %292 = vmatpush1.msra.mxu0 0.0
    %293 = vmatprep.subr.mxu0 0.0
    %294 = vmatpush1.msra.mxu0 0.0
    %295 = vmatprep.subr.mxu0 0.0
    %296 = vmatpush1.msra.mxu0 0.0
    %297 = vmatprep.subr.mxu0 0.0
    %298 = vmatpush1.msra.mxu0 0.0
    %299 = vmatprep.subr.mxu0 0.0
    %300 = vmatpush1.msra.mxu0 0.0
    %301 = vmatprep.subr.mxu0 0.0
    %302 = vmatpush1.msra.mxu0 0.0
    %303 = vmatprep.subr.mxu0 0.0
    %304 = vmatpush1.msra.mxu0 0.0
    %305 = vmatprep.subr.mxu0 0.0
    %306 = vmatpush1.msra.mxu0 0.0
    %307 = vmatprep.subr.mxu0 0.0
    %308 = vmatpush1.msra.mxu0 0.0
    %309 = vmatprep.subr.mxu0 0.0
    %310 = vmatpush1.msra.mxu0 0.0
    %311 = vmatprep.subr.mxu0 0.0
    %312 = vmatpush1.msra.mxu0 0.0
    %313 = vmatprep.subr.mxu0 0.0
    %314 = vmatpush1.msra.mxu0 0.0
    %315 = vmatprep.subr.mxu0 0.0
    %316 = vmatpush1.msra.mxu0 0.0
    %317 = vmatprep.subr.mxu0 0.0
    %318 = vmatpush1.msra.mxu0 0.0
    %319 = vmatprep.subr.mxu0 0.0
    %320 = vmatpush1.msra.mxu0 0.0
    %321 = vmatprep.subr.mxu0 0.0
    %322 = vmatpush1.msra.mxu0 0.0
    %323 = vmatprep.subr.mxu0 0.0
    %324 = vmatpush1.msra.mxu0 0.0
    %325 = vmatprep.subr.mxu0 0.0
    %326 = vmatpush1.msra.mxu0 0.0
    %327 = vmatprep.subr.mxu0 0.0
    %328 = vmatpush1.msra.mxu0 0.0
    %329 = vmatprep.subr.mxu0 0.0
    %330 = vmatpush1.msra.mxu0 0.0
    %331 = vmatprep.subr.mxu0 0.0
    %332 = vmatpush1.msra.mxu0 0.0
    %333 = vmatprep.subr.mxu0 0.0
    %334 = vmatpush1.msra.mxu0 0.0
    %335 = vmatprep.subr.mxu0 0.0
    %336 = vmatpush1.msra.mxu0 0.0
    %337 = vmatprep.subr.mxu0 0.0
    %338 = vmatpush1.msra.mxu0 0.0
    %339 = vmatprep.subr.mxu0 0.0
    %340 = vmatpush1.msra.mxu0 0.0
    %341 = vmatprep.subr.mxu0 0.0
    %342 = vmatpush1.msra.mxu0 0.0
    %343 = vmatprep.mubr.f32.mxu0 0.0
    %344 = vmatmul.mubr.f32.gmra.mrb[0].mxu0 %v131
    %v345 = vpop.f32.mrb[0].mxu0
    %v346 = vadd.f32 %v277, %v345
    %v347 = vpop.f32.mrb[0].mxu0
    %348 = vdwg.mxu0
    %v349 = vld [vmem:[#allocation2] sm:$0x3]
    %v350 = vadd.f32 %v349, %v200
    %v351 = vxor.u32 %v350, 2147483648
    %v352 = vmul.f32 %v351, 1.442695
    %v353 = vpow.pop %v352
    %v354 = vadd.f32 %v353, 1.0
    %v355 = vrcp.pop %v354
    %v356 = vmul.f32 1.0, %v355
    %v357 = vld [vmem:[#allocation5] sm:$0x3]
    %v358 = vadd.f32 %v357, %v270
    %v359 = vxor.u32 %v358, 2147483648
    %v360 = vmul.f32 %v359, 1.442695
    %v361 = vpow.pop %v360
    %v362 = vadd.f32 %v361, 1.0
    %v363 = vrcp.pop %v362
    %v364 = vmul.f32 1.0, %v363
    %v365 = vld [vmem:[#allocation7] sm:$0x3]
    %v366 = vmul.f32 %v356, %v346
    %v367 = vadd.f32 %v365, %v366
    %v368 = vtanh.pop %v367
    %v369 = vsub.f32 1.0, %v364
    %v370 = vmul.f32 %v369, %v368
    %v371 = vmul.f32 %v364, %v128
    %v372 = vadd.f32 %v370, %v371
    %v374 = vsel %vm129, %v372, 0
    %376 = vmatprep.subr.mxu0 0.0
    %377 = vmatpush1.msra.mxu0 %v115
    %378 = vmatprep.subr.mxu0 0.0
    %379 = vmatpush1.msra.mxu0 %v116
    %380 = vmatprep.subr.mxu0 0.0
    %381 = vmatpush1.msra.mxu0 %v117
    %382 = vmatprep.subr.mxu0 0.0
    %383 = vmatpush1.msra.mxu0 %v118
    %384 = vmatprep.subr.mxu0 0.0
    %385 = vmatpush1.msra.mxu0 0.0
    %386 = vmatprep.subr.mxu0 0.0
    %387 = vmatpush1.msra.mxu0 0.0
    %388 = vmatprep.subr.mxu0 0.0
    %389 = vmatpush1.msra.mxu0 0.0
    %390 = vmatprep.subr.mxu0 0.0
    %391 = vmatpush1.msra.mxu0 0.0
    %392 = vmatprep.subr.mxu0 0.0
    %393 = vmatpush1.msra.mxu0 0.0
    %394 = vmatprep.subr.mxu0 0.0
    %395 = vmatpush1.msra.mxu0 0.0
    %396 = vmatprep.subr.mxu0 0.0
    %397 = vmatpush1.msra.mxu0 0.0
    %398 = vmatprep.subr.mxu0 0.0
    %399 = vmatpush1.msra.mxu0 0.0
    %400 = vmatprep.subr.mxu0 0.0
    %401 = vmatpush1.msra.mxu0 0.0
    %402 = vmatprep.subr.mxu0 0.0
    %403 = vmatpush1.msra.mxu0 0.0
    %404 = vmatprep.subr.mxu0 0.0
    %405 = vmatpush1.msra.mxu0 0.0
    %406 = vmatprep.subr.mxu0 0.0
    %407 = vmatpush1.msra.mxu0 0.0
    %408 = vmatprep.subr.mxu0 0.0
    %409 = vmatpush1.msra.mxu0 0.0
    %410 = vmatprep.subr.mxu0 0.0
    %411 = vmatpush1.msra.mxu0 0.0
    %412 = vmatprep.subr.mxu0 0.0
    %413 = vmatpush1.msra.mxu0 0.0
    %414 = vmatprep.subr.mxu0 0.0
    %415 = vmatpush1.msra.mxu0 0.0
    %416 = vmatprep.subr.mxu0 0.0
    %417 = vmatpush1.msra.mxu0 0.0
    %418 = vmatprep.subr.mxu0 0.0
    %419 = vmatpush1.msra.mxu0 0.0
    %420 = vmatprep.subr.mxu0 0.0
    %421 = vmatpush1.msra.mxu0 0.0
    %422 = vmatprep.subr.mxu0 0.0
    %423 = vmatpush1.msra.mxu0 0.0
    %424 = vmatprep.subr.mxu0 0.0
    %425 = vmatpush1.msra.mxu0 0.0
    %426 = vmatprep.subr.mxu0 0.0
    %427 = vmatpush1.msra.mxu0 0.0
    %428 = vmatprep.subr.mxu0 0.0
    %429 = vmatpush1.msra.mxu0 0.0
    %430 = vmatprep.subr.mxu0 0.0
    %431 = vmatpush1.msra.mxu0 0.0
    %432 = vmatprep.subr.mxu0 0.0
    %433 = vmatpush1.msra.mxu0 0.0
    %434 = vmatprep.subr.mxu0 0.0
    %435 = vmatpush1.msra.mxu0 0.0
    %436 = vmatprep.subr.mxu0 0.0
    %437 = vmatpush1.msra.mxu0 0.0
    %438 = vmatprep.subr.mxu0 0.0
    %439 = vmatpush1.msra.mxu0 0.0
    %440 = vmatprep.mubr.f32.mxu0 0.0
    %441 = vmatmul.mubr.f32.gmra.mrb[0].mxu0 %v374
    %v442 = vpop.f32.mrb[0].mxu0
    %v443 = vadd.f32 0.0, %v442
    %v444 = vpop.f32.mrb[0].mxu0
    %445 = vdwg.mxu0
    %446 = vmatprep.subr.mxu0 0.0
    %447 = vmatpush1.msra.mxu0 %v119
    %448 = vmatprep.subr.mxu0 0.0
    %449 = vmatpush1.msra.mxu0 %v120
    %450 = vmatprep.subr.mxu0 0.0
    %451 = vmatpush1.msra.mxu0 %v121
    %452 = vmatprep.subr.mxu0 0.0
    %453 = vmatpush1.msra.mxu0 %v122
    %454 = vmatprep.subr.mxu0 0.0
    %455 = vmatpush1.msra.mxu0 0.0
    %456 = vmatprep.subr.mxu0 0.0
    %457 = vmatpush1.msra.mxu0 0.0
    %458 = vmatprep.subr.mxu0 0.0
    %459 = vmatpush1.msra.mxu0 0.0
    %460 = vmatprep.subr.mxu0 0.0
    %461 = vmatpush1.msra.mxu0 0.0
    %462 = vmatprep.subr.mxu0 0.0
    %463 = vmatpush1.msra.mxu0 0.0
    %464 = vmatprep.subr.mxu0 0.0
    %465 = vmatpush1.msra.mxu0 0.0
    %466 = vmatprep.subr.mxu0 0.0
    %467 = vmatpush1.msra.mxu0 0.0
    %468 = vmatprep.subr.mxu0 0.0
    %469 = vmatpush1.msra.mxu0 0.0
    %470 = vmatprep.subr.mxu0 0.0
    %471 = vmatpush1.msra.mxu0 0.0
    %472 = vmatprep.subr.mxu0 0.0
    %473 = vmatpush1.msra.mxu0 0.0
    %474 = vmatprep.subr.mxu0 0.0
    %475 = vmatpush1.msra.mxu0 0.0
    %476 = vmatprep.subr.mxu0 0.0
    %477 = vmatpush1.msra.mxu0 0.0
    %478 = vmatprep.subr.mxu0 0.0
    %479 = vmatpush1.msra.mxu0 0.0
    %480 = vmatprep.subr.mxu0 0.0
    %481 = vmatpush1.msra.mxu0 0.0
    %482 = vmatprep.subr.mxu0 0.0
    %483 = vmatpush1.msra.mxu0 0.0
    %484 = vmatprep.subr.mxu0 0.0
    %485 = vmatpush1.msra.mxu0 0.0
    %486 = vmatprep.subr.mxu0 0.0
    %487 = vmatpush1.msra.mxu0 0.0
    %488 = vmatprep.subr.mxu0 0.0
    %489 = vmatpush1.msra.mxu0 0.0
    %490 = vmatprep.subr.mxu0 0.0
    %491 = vmatpush1.msra.mxu0 0.0
    %492 = vmatprep.subr.mxu0 0.0
    %493 = vmatpush1.msra.mxu0 0.0
    %494 = vmatprep.subr.mxu0 0.0
    %495 = vmatpush1.msra.mxu0 0.0
    %496 = vmatprep.subr.mxu0 0.0
    %497 = vmatpush1.msra.mxu0 0.0
    %498 = vmatprep.subr.mxu0 0.0
    %499 = vmatpush1.msra.mxu0 0.0
    %500 = vmatprep.subr.mxu0 0.0
    %501 = vmatpush1.msra.mxu0 0.0
    %502 = vmatprep.subr.mxu0 0.0
    %503 = vmatpush1.msra.mxu0 0.0
    %504 = vmatprep.subr.mxu0 0.0
    %505 = vmatpush1.msra.mxu0 0.0
    %506 = vmatprep.subr.mxu0 0.0
    %507 = vmatpush1.msra.mxu0 0.0
    %508 = vmatprep.subr.mxu0 0.0
    %509 = vmatpush1.msra.mxu0 0.0
    %510 = vmatprep.mubr.f32.mxu0 0.0
    %511 = vmatmul.mubr.f32.gmra.mrb[0].mxu0 %v374
    %v512 = vpop.f32.mrb[0].mxu0
    %v513 = vadd.f32 0.0, %v512
    %v514 = vpop.f32.mrb[0].mxu0
    %515 = vdwg.mxu0
    %516 = vmatprep.subr.mxu0 0.0
    %517 = vmatpush1.msra.mxu0 %v123
    %518 = vmatprep.subr.mxu0 0.0
    %519 = vmatpush1.msra.mxu0 %v124
    %520 = vmatprep.subr.mxu0 0.0
    %521 = vmatpush1.msra.mxu0 %v125
    %522 = vmatprep.subr.mxu0 0.0
    %523 = vmatpush1.msra.mxu0 %v126
    %524 = vmatprep.subr.mxu0 0.0
    %525 = vmatpush1.msra.mxu0 0.0
    %526 = vmatprep.subr.mxu0 0.0
    %527 = vmatpush1.msra.mxu0 0.0
    %528 = vmatprep.subr.mxu0 0.0
    %529 = vmatpush1.msra.mxu0 0.0
    %530 = vmatprep.subr.mxu0 0.0
    %531 = vmatpush1.msra.mxu0 0.0
    %532 = vmatprep.subr.mxu0 0.0
    %533 = vmatpush1.msra.mxu0 0.0
    %534 = vmatprep.subr.mxu0 0.0
    %535 = vmatpush1.msra.mxu0 0.0
    %536 = vmatprep.subr.mxu0 0.0
    %537 = vmatpush1.msra.mxu0 0.0
    %538 = vmatprep.subr.mxu0 0.0
    %539 = vmatpush1.msra.mxu0 0.0
    %540 = vmatprep.subr.mxu0 0.0
    %541 = vmatpush1.msra.mxu0 0.0
    %542 = vmatprep.subr.mxu0 0.0
    %543 = vmatpush1.msra.mxu0 0.0
    %544 = vmatprep.subr.mxu0 0.0
    %545 = vmatpush1.msra.mxu0 0.0
    %546 = vmatprep.subr.mxu0 0.0
    %547 = vmatpush1.msra.mxu0 0.0
    %548 = vmatprep.subr.mxu0 0.0
    %549 = vmatpush1.msra.mxu0 0.0
    %550 = vmatprep.subr.mxu0 0.0
    %551 = vmatpush1.msra.mxu0 0.0
    %552 = vmatprep.subr.mxu0 0.0
    %553 = vmatpush1.msra.mxu0 0.0
    %554 = vmatprep.subr.mxu0 0.0
    %555 = vmatpush1.msra.mxu0 0.0
    %556 = vmatprep.subr.mxu0 0.0
    %557 = vmatpush1.msra.mxu0 0.0
    %558 = vmatprep.subr.mxu0 0.0
    %559 = vmatpush1.msra.mxu0 0.0
    %560 = vmatprep.subr.mxu0 0.0
    %561 = vmatpush1.msra.mxu0 0.0
    %562 = vmatprep.subr.mxu0 0.0
    %563 = vmatpush1.msra.mxu0 0.0
    %564 = vmatprep.subr.mxu0 0.0
    %565 = vmatpush1.msra.mxu0 0.0
    %566 = vmatprep.subr.mxu0 0.0
    %567 = vmatpush1.msra.mxu0 0.0
    %568 = vmatprep.subr.mxu0 0.0
    %569 = vmatpush1.msra.mxu0 0.0
    %570 = vmatprep.subr.mxu0 0.0
    %571 = vmatpush1.msra.mxu0 0.0
    %572 = vmatprep.subr.mxu0 0.0
    %573 = vmatpush1.msra.mxu0 0.0
    %574 = vmatprep.subr.mxu0 0.0
    %575 = vmatpush1.msra.mxu0 0.0
    %576 = vmatprep.subr.mxu0 0.0
    %577 = vmatpush1.msra.mxu0 0.0
    %578 = vmatprep.subr.mxu0 0.0
    %579 = vmatpush1.msra.mxu0 0.0
    %580 = vmatprep.mubr.f32.mxu0 0.0
    %581 = vmatmul.mubr.f32.gmra.mrb[0].mxu0 %v374
    %v582 = vpop.f32.mrb[0].mxu0
    %v583 = vadd.f32 %v277, %v582
    %v584 = vpop.f32.mrb[0].mxu0
    %585 = vdwg.mxu0
    %s586 = scalar_lea.vmem [#allocation2], 2
    %v587 = vld [vmem:[%s586] sm:$0x3]
    %v588 = vadd.f32 %v587, %v443
    %v589 = vxor.u32 %v588, 2147483648
    %v590 = vmul.f32 %v589, 1.442695
    %v591 = vpow.pop %v590
    %v592 = vadd.f32 %v591, 1.0
    %v593 = vrcp.pop %v592
    %v594 = vmul.f32 1.0, %v593
    %s595 = scalar_lea.vmem [#allocation5], 2
    %v596 = vld [vmem:[%s595] sm:$0x3]
    %v597 = vadd.f32 %v596, %v513
    %v598 = vxor.u32 %v597, 2147483648
    %v599 = vmul.f32 %v598, 1.442695
    %v600 = vpow.pop %v599
    %v601 = vadd.f32 %v600, 1.0
    %v602 = vrcp.pop %v601
    %v603 = vmul.f32 1.0, %v602
    %s604 = scalar_lea.vmem [#allocation7], 2
    %v605 = vld [vmem:[%s604] sm:$0x3]
    %v606 = vmul.f32 %v594, %v583
    %v607 = vadd.f32 %v605, %v606
    %v608 = vtanh.pop %v607
    %v609 = vsub.f32 1.0, %v603
    %v610 = vmul.f32 %v609, %v608
    %v611 = vmul.f32 %v603, %v372
    %v612 = vadd.f32 %v610, %v611
    %v614 = vsel %vm129, %v612, 0
    %616 = vmatprep.subr.mxu0 0.0
    %617 = vmatpush1.msra.mxu0 %v115
    %618 = vmatprep.subr.mxu0 0.0
    %619 = vmatpush1.msra.mxu0 %v116
    %620 = vmatprep.subr.mxu0 0.0
    %621 = vmatpush1.msra.mxu0 %v117
    %622 = vmatprep.subr.mxu0 0.0
    %623 = vmatpush1.msra.mxu0 %v118
    %624 = vmatprep.subr.mxu0 0.0
    %625 = vmatpush1.msra.mxu0 0.0
    %626 = vmatprep.subr.mxu0 0.0
    %627 = vmatpush1.msra.mxu0 0.0
    %628 = vmatprep.subr.mxu0 0.0
    %629 = vmatpush1.msra.mxu0 0.0
    %630 = vmatprep.subr.mxu0 0.0
    %631 = vmatpush1.msra.mxu0 0.0
    %632 = vmatprep.subr.mxu0 0.0
    %633 = vmatpush1.msra.mxu0 0.0
    %634 = vmatprep.subr.mxu0 0.0
    %635 = vmatpush1.msra.mxu0 0.0
    %636 = vmatprep.subr.mxu0 0.0
    %637 = vmatpush1.msra.mxu0 0.0
    %638 = vmatprep.subr.mxu0 0.0
    %639 = vmatpush1.msra.mxu0 0.0
    %640 = vmatprep.subr.mxu0 0.0
    %641 = vmatpush1.msra.mxu0 0.0
    %642 = vmatprep.subr.mxu0 0.0
    %643 = vmatpush1.msra.mxu0 0.0
    %644 = vmatprep.subr.mxu0 0.0
    %645 = vmatpush1.msra.mxu0 0.0
    %646 = vmatprep.subr.mxu0 0.0
    %647 = vmatpush1.msra.mxu0 0.0
    %648 = vmatprep.subr.mxu0 0.0
    %649 = vmatpush1.msra.mxu0 0.0
    %650 = vmatprep.subr.mxu0 0.0
    %651 = vmatpush1.msra.mxu0 0.0
    %652 = vmatprep.subr.mxu0 0.0
    %653 = vmatpush1.msra.mxu0 0.0
    %654 = vmatprep.subr.mxu0 0.0
    %655 = vmatpush1.msra.mxu0 0.0
    %656 = vmatprep.subr.mxu0 0.0
    %657 = vmatpush1.msra.mxu0 0.0
    %658 = vmatprep.subr.mxu0 0.0
    %659 = vmatpush1.msra.mxu0 0.0
    %660 = vmatprep.subr.mxu0 0.0
    %661 = vmatpush1.msra.mxu0 0.0
    %662 = vmatprep.subr.mxu0 0.0
    %663 = vmatpush1.msra.mxu0 0.0
    %664 = vmatprep.subr.mxu0 0.0
    %665 = vmatpush1.msra.mxu0 0.0
    %666 = vmatprep.subr.mxu0 0.0
    %667 = vmatpush1.msra.mxu0 0.0
    %668 = vmatprep.subr.mxu0 0.0
    %669 = vmatpush1.msra.mxu0 0.0
    %670 = vmatprep.subr.mxu0 0.0
    %671 = vmatpush1.msra.mxu0 0.0
    %672 = vmatprep.subr.mxu0 0.0
    %673 = vmatpush1.msra.mxu0 0.0
    %674 = vmatprep.subr.mxu0 0.0
    %675 = vmatpush1.msra.mxu0 0.0
    %676 = vmatprep.subr.mxu0 0.0
    %677 = vmatpush1.msra.mxu0 0.0
    %678 = vmatprep.subr.mxu0 0.0
    %679 = vmatpush1.msra.mxu0 0.0
    %680 = vmatprep.mubr.f32.mxu0 0.0
    %681 = vmatmul.mubr.f32.gmra.mrb[0].mxu0 %v614
    %v682 = vpop.f32.mrb[0].mxu0
    %v683 = vadd.f32 0.0, %v682
    %v684 = vpop.f32.mrb[0].mxu0
    %685 = vdwg.mxu0
    %686 = vmatprep.subr.mxu0 0.0
    %687 = vmatpush1.msra.mxu0 %v119
    %688 = vmatprep.subr.mxu0 0.0
    %689 = vmatpush1.msra.mxu0 %v120
    %690 = vmatprep.subr.mxu0 0.0
    %691 = vmatpush1.msra.mxu0 %v121
    %692 = vmatprep.subr.mxu0 0.0
    %693 = vmatpush1.msra.mxu0 %v122
    %694 = vmatprep.subr.mxu0 0.0
    %695 = vmatpush1.msra.mxu0 0.0
    %696 = vmatprep.subr.mxu0 0.0
    %697 = vmatpush1.msra.mxu0 0.0
    %698 = vmatprep.subr.mxu0 0.0
    %699 = vmatpush1.msra.mxu0 0.0
    %700 = vmatprep.subr.mxu0 0.0
    %701 = vmatpush1.msra.mxu0 0.0
    %702 = vmatprep.subr.mxu0 0.0
    %703 = vmatpush1.msra.mxu0 0.0
    %704 = vmatprep.subr.mxu0 0.0
    %705 = vmatpush1.msra.mxu0 0.0
    %706 = vmatprep.subr.mxu0 0.0
    %707 = vmatpush1.msra.mxu0 0.0
    %708 = vmatprep.subr.mxu0 0.0
    %709 = vmatpush1.msra.mxu0 0.0
    %710 = vmatprep.subr.mxu0 0.0
    %711 = vmatpush1.msra.mxu0 0.0
    %712 = vmatprep.subr.mxu0 0.0
    %713 = vmatpush1.msra.mxu0 0.0
    %714 = vmatprep.subr.mxu0 0.0
    %715 = vmatpush1.msra.mxu0 0.0
    %716 = vmatprep.subr.mxu0 0.0
    %717 = vmatpush1.msra.mxu0 0.0
    %718 = vmatprep.subr.mxu0 0.0
    %719 = vmatpush1.msra.mxu0 0.0
    %720 = vmatprep.subr.mxu0 0.0
    %721 = vmatpush1.msra.mxu0 0.0
    %722 = vmatprep.subr.mxu0 0.0
    %723 = vmatpush1.msra.mxu0 0.0
    %724 = vmatprep.subr.mxu0 0.0
    %725 = vmatpush1.msra.mxu0 0.0
    %726 = vmatprep.subr.mxu0 0.0
    %727 = vmatpush1.msra.mxu0 0.0
    %728 = vmatprep.subr.mxu0 0.0
    %729 = vmatpush1.msra.mxu0 0.0
    %730 = vmatprep.subr.mxu0 0.0
    %731 = vmatpush1.msra.mxu0 0.0
    %732 = vmatprep.subr.mxu0 0.0
    %733 = vmatpush1.msra.mxu0 0.0
    %734 = vmatprep.subr.mxu0 0.0
    %735 = vmatpush1.msra.mxu0 0.0
    %736 = vmatprep.subr.mxu0 0.0
    %737 = vmatpush1.msra.mxu0 0.0
    %738 = vmatprep.subr.mxu0 0.0
    %739 = vmatpush1.msra.mxu0 0.0
    %740 = vmatprep.subr.mxu0 0.0
    %741 = vmatpush1.msra.mxu0 0.0
    %742 = vmatprep.subr.mxu0 0.0
    %743 = vmatpush1.msra.mxu0 0.0
    %744 = vmatprep.subr.mxu0 0.0
    %745 = vmatpush1.msra.mxu0 0.0
    %746 = vmatprep.subr.mxu0 0.0
    %747 = vmatpush1.msra.mxu0 0.0
    %748 = vmatprep.subr.mxu0 0.0
    %749 = vmatpush1.msra.mxu0 0.0
    %750 = vmatprep.mubr.f32.mxu0 0.0
    %751 = vmatmul.mubr.f32.gmra.mrb[0].mxu0 %v614
    %v752 = vpop.f32.mrb[0].mxu0
    %v753 = vadd.f32 0.0, %v752
    %v754 = vpop.f32.mrb[0].mxu0
    %755 = vdwg.mxu0
    %756 = vmatprep.subr.mxu0 0.0
    %757 = vmatpush1.msra.mxu0 %v123
    %758 = vmatprep.subr.mxu0 0.0
    %759 = vmatpush1.msra.mxu0 %v124
    %760 = vmatprep.subr.mxu0 0.0
    %761 = vmatpush1.msra.mxu0 %v125
    %762 = vmatprep.subr.mxu0 0.0
    %763 = vmatpush1.msra.mxu0 %v126
    %764 = vmatprep.subr.mxu0 0.0
    %765 = vmatpush1.msra.mxu0 0.0
    %766 = vmatprep.subr.mxu0 0.0
    %767 = vmatpush1.msra.mxu0 0.0
    %768 = vmatprep.subr.mxu0 0.0
    %769 = vmatpush1.msra.mxu0 0.0
    %770 = vmatprep.subr.mxu0 0.0
    %771 = vmatpush1.msra.mxu0 0.0
    %772 = vmatprep.subr.mxu0 0.0
    %773 = vmatpush1.msra.mxu0 0.0
    %774 = vmatprep.subr.mxu0 0.0
    %775 = vmatpush1.msra.mxu0 0.0
    %776 = vmatprep.subr.mxu0 0.0
    %777 = vmatpush1.msra.mxu0 0.0
    %778 = vmatprep.subr.mxu0 0.0
    %779 = vmatpush1.msra.mxu0 0.0
    %780 = vmatprep.subr.mxu0 0.0
    %781 = vmatpush1.msra.mxu0 0.0
    %782 = vmatprep.subr.mxu0 0.0
    %783 = vmatpush1.msra.mxu0 0.0
    %784 = vmatprep.subr.mxu0 0.0
    %785 = vmatpush1.msra.mxu0 0.0
    %786 = vmatprep.subr.mxu0 0.0
    %787 = vmatpush1.msra.mxu0 0.0
    %788 = vmatprep.subr.mxu0 0.0
    %789 = vmatpush1.msra.mxu0 0.0
    %790 = vmatprep.subr.mxu0 0.0
    %791 = vmatpush1.msra.mxu0 0.0
    %792 = vmatprep.subr.mxu0 0.0
    %793 = vmatpush1.msra.mxu0 0.0
    %794 = vmatprep.subr.mxu0 0.0
    %795 = vmatpush1.msra.mxu0 0.0
    %796 = vmatprep.subr.mxu0 0.0
    %797 = vmatpush1.msra.mxu0 0.0
    %798 = vmatprep.subr.mxu0 0.0
    %799 = vmatpush1.msra.mxu0 0.0
    %800 = vmatprep.subr.mxu0 0.0
    %801 = vmatpush1.msra.mxu0 0.0
    %802 = vmatprep.subr.mxu0 0.0
    %803 = vmatpush1.msra.mxu0 0.0
    %804 = vmatprep.subr.mxu0 0.0
    %805 = vmatpush1.msra.mxu0 0.0
    %806 = vmatprep.subr.mxu0 0.0
    %807 = vmatpush1.msra.mxu0 0.0
    %808 = vmatprep.subr.mxu0 0.0
    %809 = vmatpush1.msra.mxu0 0.0
    %810 = vmatprep.subr.mxu0 0.0
    %811 = vmatpush1.msra.mxu0 0.0
    %812 = vmatprep.subr.mxu0 0.0
    %813 = vmatpush1.msra.mxu0 0.0
    %814 = vmatprep.subr.mxu0 0.0
    %815 = vmatpush1.msra.mxu0 0.0
    %816 = vmatprep.subr.mxu0 0.0
    %817 = vmatpush1.msra.mxu0 0.0
    %818 = vmatprep.subr.mxu0 0.0
    %819 = vmatpush1.msra.mxu0 0.0
    %820 = vmatprep.mubr.f32.mxu0 0.0
    %821 = vmatmul.mubr.f32.gmra.mrb[0].mxu0 %v614
    %v822 = vpop.f32.mrb[0].mxu0
    %v823 = vadd.f32 %v277, %v822
    %v824 = vpop.f32.mrb[0].mxu0
    %825 = vdwg.mxu0
    %s826 = scalar_lea.vmem [#allocation2], 4
    %v827 = vld [vmem:[%s826] sm:$0x3]
    %v828 = vadd.f32 %v827, %v683
    %v829 = vxor.u32 %v828, 2147483648
    %v830 = vmul.f32 %v829, 1.442695
    %v831 = vpow.pop %v830
    %v832 = vadd.f32 %v831, 1.0
    %v833 = vrcp.pop %v832
    %v834 = vmul.f32 1.0, %v833
    %s835 = scalar_lea.vmem [#allocation5], 4
    %v836 = vld [vmem:[%s835] sm:$0x3]
    %v837 = vadd.f32 %v836, %v753
    %v838 = vxor.u32 %v837, 2147483648
    %v839 = vmul.f32 %v838, 1.442695
    %v840 = vpow.pop %v839
    %v841 = vadd.f32 %v840, 1.0
    %v842 = vrcp.pop %v841
    %v843 = vmul.f32 1.0, %v842
    %s844 = scalar_lea.vmem [#allocation7], 4
    %v845 = vld [vmem:[%s844] sm:$0x3]
    %v846 = vmul.f32 %v834, %v823
    %v847 = vadd.f32 %v845, %v846
    %v848 = vtanh.pop %v847
    %v849 = vsub.f32 1.0, %v843
    %v850 = vmul.f32 %v849, %v848
    %v851 = vmul.f32 %v843, %v612
    %v852 = vadd.f32 %v850, %v851
    %v854 = vsel %vm129, %v852, 0
    %856 = vmatprep.subr.mxu0 0.0
    %857 = vmatpush1.msra.mxu0 %v115
    %858 = vmatprep.subr.mxu0 0.0
    %859 = vmatpush1.msra.mxu0 %v116
    %860 = vmatprep.subr.mxu0 0.0
    %861 = vmatpush1.msra.mxu0 %v117
    %862 = vmatprep.subr.mxu0 0.0
    %863 = vmatpush1.msra.mxu0 %v118
    %864 = vmatprep.subr.mxu0 0.0
    %865 = vmatpush1.msra.mxu0 0.0
    %866 = vmatprep.subr.mxu0 0.0
    %867 = vmatpush1.msra.mxu0 0.0
    %868 = vmatprep.subr.mxu0 0.0
    %869 = vmatpush1.msra.mxu0 0.0
    %870 = vmatprep.subr.mxu0 0.0
    %871 = vmatpush1.msra.mxu0 0.0
    %872 = vmatprep.subr.mxu0 0.0
    %873 = vmatpush1.msra.mxu0 0.0
    %874 = vmatprep.subr.mxu0 0.0
    %875 = vmatpush1.msra.mxu0 0.0
    %876 = vmatprep.subr.mxu0 0.0
    %877 = vmatpush1.msra.mxu0 0.0
    %878 = vmatprep.subr.mxu0 0.0
    %879 = vmatpush1.msra.mxu0 0.0
    %880 = vmatprep.subr.mxu0 0.0
    %881 = vmatpush1.msra.mxu0 0.0
    %882 = vmatprep.subr.mxu0 0.0
    %883 = vmatpush1.msra.mxu0 0.0
    %884 = vmatprep.subr.mxu0 0.0
    %885 = vmatpush1.msra.mxu0 0.0
    %886 = vmatprep.subr.mxu0 0.0
    %887 = vmatpush1.msra.mxu0 0.0
    %888 = vmatprep.subr.mxu0 0.0
    %889 = vmatpush1.msra.mxu0 0.0
    %890 = vmatprep.subr.mxu0 0.0
    %891 = vmatpush1.msra.mxu0 0.0
    %892 = vmatprep.subr.mxu0 0.0
    %893 = vmatpush1.msra.mxu0 0.0
    %894 = vmatprep.subr.mxu0 0.0
    %895 = vmatpush1.msra.mxu0 0.0
    %896 = vmatprep.subr.mxu0 0.0
    %897 = vmatpush1.msra.mxu0 0.0
    %898 = vmatprep.subr.mxu0 0.0
    %899 = vmatpush1.msra.mxu0 0.0
    %900 = vmatprep.subr.mxu0 0.0
    %901 = vmatpush1.msra.mxu0 0.0
    %902 = vmatprep.subr.mxu0 0.0
    %903 = vmatpush1.msra.mxu0 0.0
    %904 = vmatprep.subr.mxu0 0.0
    %905 = vmatpush1.msra.mxu0 0.0
    %906 = vmatprep.subr.mxu0 0.0
    %907 = vmatpush1.msra.mxu0 0.0
    %908 = vmatprep.subr.mxu0 0.0
    %909 = vmatpush1.msra.mxu0 0.0
    %910 = vmatprep.subr.mxu0 0.0
    %911 = vmatpush1.msra.mxu0 0.0
    %912 = vmatprep.subr.mxu0 0.0
    %913 = vmatpush1.msra.mxu0 0.0
    %914 = vmatprep.subr.mxu0 0.0
    %915 = vmatpush1.msra.mxu0 0.0
    %916 = vmatprep.subr.mxu0 0.0
    %917 = vmatpush1.msra.mxu0 0.0
    %918 = vmatprep.subr.mxu0 0.0
    %919 = vmatpush1.msra.mxu0 0.0
    %920 = vmatprep.mubr.f32.mxu0 0.0
    %921 = vmatmul.mubr.f32.gmra.mrb[0].mxu0 %v854
    %v922 = vpop.f32.mrb[0].mxu0
    %v923 = vadd.f32 0.0, %v922
    %v924 = vpop.f32.mrb[0].mxu0
    %925 = vdwg.mxu0
    %926 = vmatprep.subr.mxu0 0.0
    %927 = vmatpush1.msra.mxu0 %v119
    %928 = vmatprep.subr.mxu0 0.0
    %929 = vmatpush1.msra.mxu0 %v120
    %930 = vmatprep.subr.mxu0 0.0
    %931 = vmatpush1.msra.mxu0 %v121
    %932 = vmatprep.subr.mxu0 0.0
    %933 = vmatpush1.msra.mxu0 %v122
    %934 = vmatprep.subr.mxu0 0.0
    %935 = vmatpush1.msra.mxu0 0.0
    %936 = vmatprep.subr.mxu0 0.0
    %937 = vmatpush1.msra.mxu0 0.0
    %938 = vmatprep.subr.mxu0 0.0
    %939 = vmatpush1.msra.mxu0 0.0
    %940 = vmatprep.subr.mxu0 0.0
    %941 = vmatpush1.msra.mxu0 0.0
    %942 = vmatprep.subr.mxu0 0.0
    %943 = vmatpush1.msra.mxu0 0.0
    %944 = vmatprep.subr.mxu0 0.0
    %945 = vmatpush1.msra.mxu0 0.0
    %946 = vmatprep.subr.mxu0 0.0
    %947 = vmatpush1.msra.mxu0 0.0
    %948 = vmatprep.subr.mxu0 0.0
    %949 = vmatpush1.msra.mxu0 0.0
    %950 = vmatprep.subr.mxu0 0.0
    %951 = vmatpush1.msra.mxu0 0.0
    %952 = vmatprep.subr.mxu0 0.0
    %953 = vmatpush1.msra.mxu0 0.0
    %954 = vmatprep.subr.mxu0 0.0
    %955 = vmatpush1.msra.mxu0 0.0
    %956 = vmatprep.subr.mxu0 0.0
    %957 = vmatpush1.msra.mxu0 0.0
    %958 = vmatprep.subr.mxu0 0.0
    %959 = vmatpush1.msra.mxu0 0.0
    %960 = vmatprep.subr.mxu0 0.0
    %961 = vmatpush1.msra.mxu0 0.0
    %962 = vmatprep.subr.mxu0 0.0
    %963 = vmatpush1.msra.mxu0 0.0
    %964 = vmatprep.subr.mxu0 0.0
    %965 = vmatpush1.msra.mxu0 0.0
    %966 = vmatprep.subr.mxu0 0.0
    %967 = vmatpush1.msra.mxu0 0.0
    %968 = vmatprep.subr.mxu0 0.0
    %969 = vmatpush1.msra.mxu0 0.0
    %970 = vmatprep.subr.mxu0 0.0
    %971 = vmatpush1.msra.mxu0 0.0
    %972 = vmatprep.subr.mxu0 0.0
    %973 = vmatpush1.msra.mxu0 0.0
    %974 = vmatprep.subr.mxu0 0.0
    %975 = vmatpush1.msra.mxu0 0.0
    %976 = vmatprep.subr.mxu0 0.0
    %977 = vmatpush1.msra.mxu0 0.0
    %978 = vmatprep.subr.mxu0 0.0
    %979 = vmatpush1.msra.mxu0 0.0
    %980 = vmatprep.subr.mxu0 0.0
    %981 = vmatpush1.msra.mxu0 0.0
    %982 = vmatprep.subr.mxu0 0.0
    %983 = vmatpush1.msra.mxu0 0.0
    %984 = vmatprep.subr.mxu0 0.0
    %985 = vmatpush1.msra.mxu0 0.0
    %986 = vmatprep.subr.mxu0 0.0
    %987 = vmatpush1.msra.mxu0 0.0
    %988 = vmatprep.subr.mxu0 0.0
    %989 = vmatpush1.msra.mxu0 0.0
    %990 = vmatprep.mubr.f32.mxu0 0.0
    %991 = vmatmul.mubr.f32.gmra.mrb[0].mxu0 %v854
    %v992 = vpop.f32.mrb[0].mxu0
    %v993 = vadd.f32 0.0, %v992
    %v994 = vpop.f32.mrb[0].mxu0
    %995 = vdwg.mxu0
    %996 = vmatprep.subr.mxu0 0.0
    %997 = vmatpush1.msra.mxu0 %v123
    %998 = vmatprep.subr.mxu0 0.0
    %999 = vmatpush1.msra.mxu0 %v124
    %1000 = vmatprep.subr.mxu0 0.0
    %1001 = vmatpush1.msra.mxu0 %v125
    %1002 = vmatprep.subr.mxu0 0.0
    %1003 = vmatpush1.msra.mxu0 %v126
    %1004 = vmatprep.subr.mxu0 0.0
    %1005 = vmatpush1.msra.mxu0 0.0
    %1006 = vmatprep.subr.mxu0 0.0
    %1007 = vmatpush1.msra.mxu0 0.0
    %1008 = vmatprep.subr.mxu0 0.0
    %1009 = vmatpush1.msra.mxu0 0.0
    %1010 = vmatprep.subr.mxu0 0.0
    %1011 = vmatpush1.msra.mxu0 0.0
    %1012 = vmatprep.subr.mxu0 0.0
    %1013 = vmatpush1.msra.mxu0 0.0
    %1014 = vmatprep.subr.mxu0 0.0
    %1015 = vmatpush1.msra.mxu0 0.0
    %1016 = vmatprep.subr.mxu0 0.0
    %1017 = vmatpush1.msra.mxu0 0.0
    %1018 = vmatprep.subr.mxu0 0.0
    %1019 = vmatpush1.msra.mxu0 0.0
    %1020 = vmatprep.subr.mxu0 0.0
    %1021 = vmatpush1.msra.mxu0 0.0
    %1022 = vmatprep.subr.mxu0 0.0
    %1023 = vmatpush1.msra.mxu0 0.0
    %1024 = vmatprep.subr.mxu0 0.0
    %1025 = vmatpush1.msra.mxu0 0.0
    %1026 = vmatprep.subr.mxu0 0.0
    %1027 = vmatpush1.msra.mxu0 0.0
    %1028 = vmatprep.subr.mxu0 0.0
    %1029 = vmatpush1.msra.mxu0 0.0
    %1030 = vmatprep.subr.mxu0 0.0
    %1031 = vmatpush1.msra.mxu0 0.0
    %1032 = vmatprep.subr.mxu0 0.0
    %1033 = vmatpush1.msra.mxu0 0.0
    %1034 = vmatprep.subr.mxu0 0.0
    %1035 = vmatpush1.msra.mxu0 0.0
    %1036 = vmatprep.subr.mxu0 0.0
    %1037 = vmatpush1.msra.mxu0 0.0
    %1038 = vmatprep.subr.mxu0 0.0
    %1039 = vmatpush1.msra.mxu0 0.0
    %1040 = vmatprep.subr.mxu0 0.0
    %1041 = vmatpush1.msra.mxu0 0.0
    %1042 = vmatprep.subr.mxu0 0.0
    %1043 = vmatpush1.msra.mxu0 0.0
    %1044 = vmatprep.subr.mxu0 0.0
    %1045 = vmatpush1.msra.mxu0 0.0
    %1046 = vmatprep.subr.mxu0 0.0
    %1047 = vmatpush1.msra.mxu0 0.0
    %1048 = vmatprep.subr.mxu0 0.0
    %1049 = vmatpush1.msra.mxu0 0.0
    %1050 = vmatprep.subr.mxu0 0.0
    %1051 = vmatpush1.msra.mxu0 0.0
    %1052 = vmatprep.subr.mxu0 0.0
    %1053 = vmatpush1.msra.mxu0 0.0
    %1054 = vmatprep.subr.mxu0 0.0
    %1055 = vmatpush1.msra.mxu0 0.0
    %1056 = vmatprep.subr.mxu0 0.0
    %1057 = vmatpush1.msra.mxu0 0.0
    %1058 = vmatprep.subr.mxu0 0.0
    %1059 = vmatpush1.msra.mxu0 0.0
    %1060 = vmatprep.mubr.f32.mxu0 0.0
    %1061 = vmatmul.mubr.f32.gmra.mrb[0].mxu0 %v854
    %v1062 = vpop.f32.mrb[0].mxu0
    %v1063 = vadd.f32 %v277, %v1062
    %v1064 = vpop.f32.mrb[0].mxu0
    %1065 = vdwg.mxu0
    %s1066 = scalar_lea.vmem [#allocation2], 6
    %v1067 = vld [vmem:[%s1066] sm:$0x3]
    %v1068 = vadd.f32 %v1067, %v923
    %v1069 = vxor.u32 %v1068, 2147483648
    %v1070 = vmul.f32 %v1069, 1.442695
    %v1071 = vpow.pop %v1070
    %v1072 = vadd.f32 %v1071, 1.0
    %v1073 = vrcp.pop %v1072
    %v1074 = vmul.f32 1.0, %v1073
    %s1075 = scalar_lea.vmem [#allocation5], 6
    %v1076 = vld [vmem:[%s1075] sm:$0x3]
    %v1077 = vadd.f32 %v1076, %v993
    %v1078 = vxor.u32 %v1077, 2147483648
    %v1079 = vmul.f32 %v1078, 1.442695
    %v1080 = vpow.pop %v1079
    %v1081 = vadd.f32 %v1080, 1.0
    %v1082 = vrcp.pop %v1081
    %v1083 = vmul.f32 1.0, %v1082
    %s1084 = scalar_lea.vmem [#allocation7], 6
    %v1085 = vld [vmem:[%s1084] sm:$0x3]
    %v1086 = vmul.f32 %v1074, %v1063
    %v1087 = vadd.f32 %v1085, %v1086
    %v1088 = vtanh.pop %v1087
    %v1089 = vsub.f32 1.0, %v1083
    %v1090 = vmul.f32 %v1089, %v1088
    %v1091 = vmul.f32 %v1083, %v852
    %v1092 = vadd.f32 %v1090, %v1091
    %v1094 = vsel %vm129, %v1092, 0
    %1096 = vmatprep.subr.mxu0 0.0
    %1097 = vmatpush1.msra.mxu0 %v115
    %1098 = vmatprep.subr.mxu0 0.0
    %1099 = vmatpush1.msra.mxu0 %v116
    %1100 = vmatprep.subr.mxu0 0.0
    %1101 = vmatpush1.msra.mxu0 %v117
    %1102 = vmatprep.subr.mxu0 0.0
    %1103 = vmatpush1.msra.mxu0 %v118
    %1104 = vmatprep.subr.mxu0 0.0
    %1105 = vmatpush1.msra.mxu0 0.0
    %1106 = vmatprep.subr.mxu0 0.0
    %1107 = vmatpush1.msra.mxu0 0.0
    %1108 = vmatprep.subr.mxu0 0.0
    %1109 = vmatpush1.msra.mxu0 0.0
    %1110 = vmatprep.subr.mxu0 0.0
    %1111 = vmatpush1.msra.mxu0 0.0
    %1112 = vmatprep.subr.mxu0 0.0
    %1113 = vmatpush1.msra.mxu0 0.0
    %1114 = vmatprep.subr.mxu0 0.0
    %1115 = vmatpush1.msra.mxu0 0.0
    %1116 = vmatprep.subr.mxu0 0.0
    %1117 = vmatpush1.msra.mxu0 0.0
    %1118 = vmatprep.subr.mxu0 0.0
    %1119 = vmatpush1.msra.mxu0 0.0
    %1120 = vmatprep.subr.mxu0 0.0
    %1121 = vmatpush1.msra.mxu0 0.0
    %1122 = vmatprep.subr.mxu0 0.0
    %1123 = vmatpush1.msra.mxu0 0.0
    %1124 = vmatprep.subr.mxu0 0.0
    %1125 = vmatpush1.msra.mxu0 0.0
    %1126 = vmatprep.subr.mxu0 0.0
    %1127 = vmatpush1.msra.mxu0 0.0
    %1128 = vmatprep.subr.mxu0 0.0
    %1129 = vmatpush1.msra.mxu0 0.0
    %1130 = vmatprep.subr.mxu0 0.0
    %1131 = vmatpush1.msra.mxu0 0.0
    %1132 = vmatprep.subr.mxu0 0.0
    %1133 = vmatpush1.msra.mxu0 0.0
    %1134 = vmatprep.subr.mxu0 0.0
    %1135 = vmatpush1.msra.mxu0 0.0
    %1136 = vmatprep.subr.mxu0 0.0
    %1137 = vmatpush1.msra.mxu0 0.0
    %1138 = vmatprep.subr.mxu0 0.0
    %1139 = vmatpush1.msra.mxu0 0.0
    %1140 = vmatprep.subr.mxu0 0.0
    %1141 = vmatpush1.msra.mxu0 0.0
    %1142 = vmatprep.subr.mxu0 0.0
    %1143 = vmatpush1.msra.mxu0 0.0
    %1144 = vmatprep.subr.mxu0 0.0
    %1145 = vmatpush1.msra.mxu0 0.0
    %1146 = vmatprep.subr.mxu0 0.0
    %1147 = vmatpush1.msra.mxu0 0.0
    %1148 = vmatprep.subr.mxu0 0.0
    %1149 = vmatpush1.msra.mxu0 0.0
    %1150 = vmatprep.subr.mxu0 0.0
    %1151 = vmatpush1.msra.mxu0 0.0
    %1152 = vmatprep.subr.mxu0 0.0
    %1153 = vmatpush1.msra.mxu0 0.0
    %1154 = vmatprep.subr.mxu0 0.0
    %1155 = vmatpush1.msra.mxu0 0.0
    %1156 = vmatprep.subr.mxu0 0.0
    %1157 = vmatpush1.msra.mxu0 0.0
    %1158 = vmatprep.subr.mxu0 0.0
    %1159 = vmatpush1.msra.mxu0 0.0
    %1160 = vmatprep.mubr.f32.mxu0 0.0
    %1161 = vmatmul.mubr.f32.gmra.mrb[0].mxu0 %v1094
    %v1162 = vpop.f32.mrb[0].mxu0
    %v1163 = vadd.f32 0.0, %v1162
    %v1164 = vpop.f32.mrb[0].mxu0
    %1165 = vdwg.mxu0
    %1166 = vmatprep.subr.mxu0 0.0
    %1167 = vmatpush1.msra.mxu0 %v119
    %1168 = vmatprep.subr.mxu0 0.0
    %1169 = vmatpush1.msra.mxu0 %v120
    %1170 = vmatprep.subr.mxu0 0.0
    %1171 = vmatpush1.msra.mxu0 %v121
    %1172 = vmatprep.subr.mxu0 0.0
    %1173 = vmatpush1.msra.mxu0 %v122
    %1174 = vmatprep.subr.mxu0 0.0
    %1175 = vmatpush1.msra.mxu0 0.0
    %1176 = vmatprep.subr.mxu0 0.0
    %1177 = vmatpush1.msra.mxu0 0.0
    %1178 = vmatprep.subr.mxu0 0.0
    %1179 = vmatpush1.msra.mxu0 0.0
    %1180 = vmatprep.subr.mxu0 0.0
    %1181 = vmatpush1.msra.mxu0 0.0
    %1182 = vmatprep.subr.mxu0 0.0
    %1183 = vmatpush1.msra.mxu0 0.0
    %1184 = vmatprep.subr.mxu0 0.0
    %1185 = vmatpush1.msra.mxu0 0.0
    %1186 = vmatprep.subr.mxu0 0.0
    %1187 = vmatpush1.msra.mxu0 0.0
    %1188 = vmatprep.subr.mxu0 0.0
    %1189 = vmatpush1.msra.mxu0 0.0
    %1190 = vmatprep.subr.mxu0 0.0
    %1191 = vmatpush1.msra.mxu0 0.0
    %1192 = vmatprep.subr.mxu0 0.0
    %1193 = vmatpush1.msra.mxu0 0.0
    %1194 = vmatprep.subr.mxu0 0.0
    %1195 = vmatpush1.msra.mxu0 0.0
    %1196 = vmatprep.subr.mxu0 0.0
    %1197 = vmatpush1.msra.mxu0 0.0
    %1198 = vmatprep.subr.mxu0 0.0
    %1199 = vmatpush1.msra.mxu0 0.0
    %1200 = vmatprep.subr.mxu0 0.0
    %1201 = vmatpush1.msra.mxu0 0.0
    %1202 = vmatprep.subr.mxu0 0.0
    %1203 = vmatpush1.msra.mxu0 0.0
    %1204 = vmatprep.subr.mxu0 0.0
    %1205 = vmatpush1.msra.mxu0 0.0
    %1206 = vmatprep.subr.mxu0 0.0
    %1207 = vmatpush1.msra.mxu0 0.0
    %1208 = vmatprep.subr.mxu0 0.0
    %1209 = vmatpush1.msra.mxu0 0.0
    %1210 = vmatprep.subr.mxu0 0.0
    %1211 = vmatpush1.msra.mxu0 0.0
    %1212 = vmatprep.subr.mxu0 0.0
    %1213 = vmatpush1.msra.mxu0 0.0
    %1214 = vmatprep.subr.mxu0 0.0
    %1215 = vmatpush1.msra.mxu0 0.0
    %1216 = vmatprep.subr.mxu0 0.0
    %1217 = vmatpush1.msra.mxu0 0.0
    %1218 = vmatprep.subr.mxu0 0.0
    %1219 = vmatpush1.msra.mxu0 0.0
    %1220 = vmatprep.subr.mxu0 0.0
    %1221 = vmatpush1.msra.mxu0 0.0
    %1222 = vmatprep.subr.mxu0 0.0
    %1223 = vmatpush1.msra.mxu0 0.0
    %1224 = vmatprep.subr.mxu0 0.0
    %1225 = vmatpush1.msra.mxu0 0.0
    %1226 = vmatprep.subr.mxu0 0.0
    %1227 = vmatpush1.msra.mxu0 0.0
    %1228 = vmatprep.subr.mxu0 0.0
    %1229 = vmatpush1.msra.mxu0 0.0
    %1230 = vmatprep.mubr.f32.mxu0 0.0
    %1231 = vmatmul.mubr.f32.gmra.mrb[0].mxu0 %v1094
    %v1232 = vpop.f32.mrb[0].mxu0
    %v1233 = vadd.f32 0.0, %v1232
    %v1234 = vpop.f32.mrb[0].mxu0
    %1235 = vdwg.mxu0
    %1236 = vmatprep.subr.mxu0 0.0
    %1237 = vmatpush1.msra.mxu0 %v123
    %1238 = vmatprep.subr.mxu0 0.0
    %1239 = vmatpush1.msra.mxu0 %v124
    %1240 = vmatprep.subr.mxu0 0.0
    %1241 = vmatpush1.msra.mxu0 %v125
    %1242 = vmatprep.subr.mxu0 0.0
    %1243 = vmatpush1.msra.mxu0 %v126
    %1244 = vmatprep.subr.mxu0 0.0
    %1245 = vmatpush1.msra.mxu0 0.0
    %1246 = vmatprep.subr.mxu0 0.0
    %1247 = vmatpush1.msra.mxu0 0.0
    %1248 = vmatprep.subr.mxu0 0.0
    %1249 = vmatpush1.msra.mxu0 0.0
    %1250 = vmatprep.subr.mxu0 0.0
    %1251 = vmatpush1.msra.mxu0 0.0
    %1252 = vmatprep.subr.mxu0 0.0
    %1253 = vmatpush1.msra.mxu0 0.0
    %1254 = vmatprep.subr.mxu0 0.0
    %1255 = vmatpush1.msra.mxu0 0.0
    %1256 = vmatprep.subr.mxu0 0.0
    %1257 = vmatpush1.msra.mxu0 0.0
    %1258 = vmatprep.subr.mxu0 0.0
    %1259 = vmatpush1.msra.mxu0 0.0
    %1260 = vmatprep.subr.mxu0 0.0
    %1261 = vmatpush1.msra.mxu0 0.0
    %1262 = vmatprep.subr.mxu0 0.0
    %1263 = vmatpush1.msra.mxu0 0.0
    %1264 = vmatprep.subr.mxu0 0.0
    %1265 = vmatpush1.msra.mxu0 0.0
    %1266 = vmatprep.subr.mxu0 0.0
    %1267 = vmatpush1.msra.mxu0 0.0
    %1268 = vmatprep.subr.mxu0 0.0
    %1269 = vmatpush1.msra.mxu0 0.0
    %1270 = vmatprep.subr.mxu0 0.0
    %1271 = vmatpush1.msra.mxu0 0.0
    %1272 = vmatprep.subr.mxu0 0.0
    %1273 = vmatpush1.msra.mxu0 0.0
    %1274 = vmatprep.subr.mxu0 0.0
    %1275 = vmatpush1.msra.mxu0 0.0
    %1276 = vmatprep.subr.mxu0 0.0
    %1277 = vmatpush1.msra.mxu0 0.0
    %1278 = vmatprep.subr.mxu0 0.0
    %1279 = vmatpush1.msra.mxu0 0.0
    %1280 = vmatprep.subr.mxu0 0.0
    %1281 = vmatpush1.msra.mxu0 0.0
    %1282 = vmatprep.subr.mxu0 0.0
    %1283 = vmatpush1.msra.mxu0 0.0
    %1284 = vmatprep.subr.mxu0 0.0
    %1285 = vmatpush1.msra.mxu0 0.0
    %1286 = vmatprep.subr.mxu0 0.0
    %1287 = vmatpush1.msra.mxu0 0.0
    %1288 = vmatprep.subr.mxu0 0.0
    %1289 = vmatpush1.msra.mxu0 0.0
    %1290 = vmatprep.subr.mxu0 0.0
    %1291 = vmatpush1.msra.mxu0 0.0
    %1292 = vmatprep.subr.mxu0 0.0
    %1293 = vmatpush1.msra.mxu0 0.0
    %1294 = vmatprep.subr.mxu0 0.0
    %1295 = vmatpush1.msra.mxu0 0.0
    %1296 = vmatprep.subr.mxu0 0.0
    %1297 = vmatpush1.msra.mxu0 0.0
    %1298 = vmatprep.subr.mxu0 0.0
    %1299 = vmatpush1.msra.mxu0 0.0
    %1300 = vmatprep.mubr.f32.mxu0 0.0
    %1301 = vmatmul.mubr.f32.gmra.mrb[0].mxu0 %v1094
    %v1302 = vpop.f32.mrb[0].mxu0
    %v1303 = vadd.f32 %v277, %v1302
    %v1304 = vpop.f32.mrb[0].mxu0
    %1305 = vdwg.mxu0
    %s1306 = scalar_lea.vmem [#allocation2], 8
    %v1307 = vld [vmem:[%s1306] sm:$0x3]
    %v1308 = vadd.f32 %v1307, %v1163
    %v1309 = vxor.u32 %v1308, 2147483648
    %v1310 = vmul.f32 %v1309, 1.442695
    %v1311 = vpow.pop %v1310
    %v1312 = vadd.f32 %v1311, 1.0
    %v1313 = vrcp.pop %v1312
    %v1314 = vmul.f32 1.0, %v1313
    %s1315 = scalar_lea.vmem [#allocation5], 8
    %v1316 = vld [vmem:[%s1315] sm:$0x3]
    %v1317 = vadd.f32 %v1316, %v1233
    %v1318 = vxor.u32 %v1317, 2147483648
    %v1319 = vmul.f32 %v1318, 1.442695
    %v1320 = vpow.pop %v1319
    %v1321 = vadd.f32 %v1320, 1.0
    %v1322 = vrcp.pop %v1321
    %v1323 = vmul.f32 1.0, %v1322
    %s1324 = scalar_lea.vmem [#allocation7], 8
    %v1325 = vld [vmem:[%s1324] sm:$0x3]
    %v1326 = vmul.f32 %v1314, %v1303
    %v1327 = vadd.f32 %v1325, %v1326
    %v1328 = vtanh.pop %v1327
    %v1329 = vsub.f32 1.0, %v1323
    %v1330 = vmul.f32 %v1329, %v1328
    %v1331 = vmul.f32 %v1323, %v1092
    %v1332 = vadd.f32 %v1330, %v1331
    %v1334 = vsel %vm129, %v1332, 0
    %1336 = vmatprep.subr.mxu0 0.0
    %1337 = vmatpush1.msra.mxu0 %v115
    %1338 = vmatprep.subr.mxu0 0.0
    %1339 = vmatpush1.msra.mxu0 %v116
    %1340 = vmatprep.subr.mxu0 0.0
    %1341 = vmatpush1.msra.mxu0 %v117
    %1342 = vmatprep.subr.mxu0 0.0
    %1343 = vmatpush1.msra.mxu0 %v118
    %1344 = vmatprep.subr.mxu0 0.0
    %1345 = vmatpush1.msra.mxu0 0.0
    %1346 = vmatprep.subr.mxu0 0.0
    %1347 = vmatpush1.msra.mxu0 0.0
    %1348 = vmatprep.subr.mxu0 0.0
    %1349 = vmatpush1.msra.mxu0 0.0
    %1350 = vmatprep.subr.mxu0 0.0
    %1351 = vmatpush1.msra.mxu0 0.0
    %1352 = vmatprep.subr.mxu0 0.0
    %1353 = vmatpush1.msra.mxu0 0.0
    %1354 = vmatprep.subr.mxu0 0.0
    %1355 = vmatpush1.msra.mxu0 0.0
    %1356 = vmatprep.subr.mxu0 0.0
    %1357 = vmatpush1.msra.mxu0 0.0
    %1358 = vmatprep.subr.mxu0 0.0
    %1359 = vmatpush1.msra.mxu0 0.0
    %1360 = vmatprep.subr.mxu0 0.0
    %1361 = vmatpush1.msra.mxu0 0.0
    %1362 = vmatprep.subr.mxu0 0.0
    %1363 = vmatpush1.msra.mxu0 0.0
    %1364 = vmatprep.subr.mxu0 0.0
    %1365 = vmatpush1.msra.mxu0 0.0
    %1366 = vmatprep.subr.mxu0 0.0
    %1367 = vmatpush1.msra.mxu0 0.0
    %1368 = vmatprep.subr.mxu0 0.0
    %1369 = vmatpush1.msra.mxu0 0.0
    %1370 = vmatprep.subr.mxu0 0.0
    %1371 = vmatpush1.msra.mxu0 0.0
    %1372 = vmatprep.subr.mxu0 0.0
    %1373 = vmatpush1.msra.mxu0 0.0
    %1374 = vmatprep.subr.mxu0 0.0
    %1375 = vmatpush1.msra.mxu0 0.0
    %1376 = vmatprep.subr.mxu0 0.0
    %1377 = vmatpush1.msra.mxu0 0.0
    %1378 = vmatprep.subr.mxu0 0.0
    %1379 = vmatpush1.msra.mxu0 0.0
    %1380 = vmatprep.subr.mxu0 0.0
    %1381 = vmatpush1.msra.mxu0 0.0
    %1382 = vmatprep.subr.mxu0 0.0
    %1383 = vmatpush1.msra.mxu0 0.0
    %1384 = vmatprep.subr.mxu0 0.0
    %1385 = vmatpush1.msra.mxu0 0.0
    %1386 = vmatprep.subr.mxu0 0.0
    %1387 = vmatpush1.msra.mxu0 0.0
    %1388 = vmatprep.subr.mxu0 0.0
    %1389 = vmatpush1.msra.mxu0 0.0
    %1390 = vmatprep.subr.mxu0 0.0
    %1391 = vmatpush1.msra.mxu0 0.0
    %1392 = vmatprep.subr.mxu0 0.0
    %1393 = vmatpush1.msra.mxu0 0.0
    %1394 = vmatprep.subr.mxu0 0.0
    %1395 = vmatpush1.msra.mxu0 0.0
    %1396 = vmatprep.subr.mxu0 0.0
    %1397 = vmatpush1.msra.mxu0 0.0
    %1398 = vmatprep.subr.mxu0 0.0
    %1399 = vmatpush1.msra.mxu0 0.0
    %1400 = vmatprep.mubr.f32.mxu0 0.0
    %1401 = vmatmul.mubr.f32.gmra.mrb[0].mxu0 %v1334
    %v1402 = vpop.f32.mrb[0].mxu0
    %v1403 = vadd.f32 0.0, %v1402
    %v1404 = vpop.f32.mrb[0].mxu0
    %1405 = vdwg.mxu0
    %1406 = vmatprep.subr.mxu0 0.0
    %1407 = vmatpush1.msra.mxu0 %v119
    %1408 = vmatprep.subr.mxu0 0.0
    %1409 = vmatpush1.msra.mxu0 %v120
    %1410 = vmatprep.subr.mxu0 0.0
    %1411 = vmatpush1.msra.mxu0 %v121
    %1412 = vmatprep.subr.mxu0 0.0
    %1413 = vmatpush1.msra.mxu0 %v122
    %1414 = vmatprep.subr.mxu0 0.0
    %1415 = vmatpush1.msra.mxu0 0.0
    %1416 = vmatprep.subr.mxu0 0.0
    %1417 = vmatpush1.msra.mxu0 0.0
    %1418 = vmatprep.subr.mxu0 0.0
    %1419 = vmatpush1.msra.mxu0 0.0
    %1420 = vmatprep.subr.mxu0 0.0
    %1421 = vmatpush1.msra.mxu0 0.0
    %1422 = vmatprep.subr.mxu0 0.0
    %1423 = vmatpush1.msra.mxu0 0.0
    %1424 = vmatprep.subr.mxu0 0.0
    %1425 = vmatpush1.msra.mxu0 0.0
    %1426 = vmatprep.subr.mxu0 0.0
    %1427 = vmatpush1.msra.mxu0 0.0
    %1428 = vmatprep.subr.mxu0 0.0
    %1429 = vmatpush1.msra.mxu0 0.0
    %1430 = vmatprep.subr.mxu0 0.0
    %1431 = vmatpush1.msra.mxu0 0.0
    %1432 = vmatprep.subr.mxu0 0.0
    %1433 = vmatpush1.msra.mxu0 0.0
    %1434 = vmatprep.subr.mxu0 0.0
    %1435 = vmatpush1.msra.mxu0 0.0
    %1436 = vmatprep.subr.mxu0 0.0
    %1437 = vmatpush1.msra.mxu0 0.0
    %1438 = vmatprep.subr.mxu0 0.0
    %1439 = vmatpush1.msra.mxu0 0.0
    %1440 = vmatprep.subr.mxu0 0.0
    %1441 = vmatpush1.msra.mxu0 0.0
    %1442 = vmatprep.subr.mxu0 0.0
    %1443 = vmatpush1.msra.mxu0 0.0
    %1444 = vmatprep.subr.mxu0 0.0
    %1445 = vmatpush1.msra.mxu0 0.0
    %1446 = vmatprep.subr.mxu0 0.0
    %1447 = vmatpush1.msra.mxu0 0.0
    %1448 = vmatprep.subr.mxu0 0.0
    %1449 = vmatpush1.msra.mxu0 0.0
    %1450 = vmatprep.subr.mxu0 0.0
    %1451 = vmatpush1.msra.mxu0 0.0
    %1452 = vmatprep.subr.mxu0 0.0
    %1453 = vmatpush1.msra.mxu0 0.0
    %1454 = vmatprep.subr.mxu0 0.0
    %1455 = vmatpush1.msra.mxu0 0.0
    %1456 = vmatprep.subr.mxu0 0.0
    %1457 = vmatpush1.msra.mxu0 0.0
    %1458 = vmatprep.subr.mxu0 0.0
    %1459 = vmatpush1.msra.mxu0 0.0
    %1460 = vmatprep.subr.mxu0 0.0
    %1461 = vmatpush1.msra.mxu0 0.0
    %1462 = vmatprep.subr.mxu0 0.0
    %1463 = vmatpush1.msra.mxu0 0.0
    %1464 = vmatprep.subr.mxu0 0.0
    %1465 = vmatpush1.msra.mxu0 0.0
    %1466 = vmatprep.subr.mxu0 0.0
    %1467 = vmatpush1.msra.mxu0 0.0
    %1468 = vmatprep.subr.mxu0 0.0
    %1469 = vmatpush1.msra.mxu0 0.0
    %1470 = vmatprep.mubr.f32.mxu0 0.0
    %1471 = vmatmul.mubr.f32.gmra.mrb[0].mxu0 %v1334
    %v1472 = vpop.f32.mrb[0].mxu0
    %v1473 = vadd.f32 0.0, %v1472
    %v1474 = vpop.f32.mrb[0].mxu0
    %1475 = vdwg.mxu0
    %1476 = vmatprep.subr.mxu0 0.0
    %1477 = vmatpush1.msra.mxu0 %v123
    %1478 = vmatprep.subr.mxu0 0.0
    %1479 = vmatpush1.msra.mxu0 %v124
    %1480 = vmatprep.subr.mxu0 0.0
    %1481 = vmatpush1.msra.mxu0 %v125
    %1482 = vmatprep.subr.mxu0 0.0
    %1483 = vmatpush1.msra.mxu0 %v126
    %1484 = vmatprep.subr.mxu0 0.0
    %1485 = vmatpush1.msra.mxu0 0.0
    %1486 = vmatprep.subr.mxu0 0.0
    %1487 = vmatpush1.msra.mxu0 0.0
    %1488 = vmatprep.subr.mxu0 0.0
    %1489 = vmatpush1.msra.mxu0 0.0
    %1490 = vmatprep.subr.mxu0 0.0
    %1491 = vmatpush1.msra.mxu0 0.0
    %1492 = vmatprep.subr.mxu0 0.0
    %1493 = vmatpush1.msra.mxu0 0.0
    %1494 = vmatprep.subr.mxu0 0.0
    %1495 = vmatpush1.msra.mxu0 0.0
    %1496 = vmatprep.subr.mxu0 0.0
    %1497 = vmatpush1.msra.mxu0 0.0
    %1498 = vmatprep.subr.mxu0 0.0
    %1499 = vmatpush1.msra.mxu0 0.0
    %1500 = vmatprep.subr.mxu0 0.0
    %1501 = vmatpush1.msra.mxu0 0.0
    %1502 = vmatprep.subr.mxu0 0.0
    %1503 = vmatpush1.msra.mxu0 0.0
    %1504 = vmatprep.subr.mxu0 0.0
    %1505 = vmatpush1.msra.mxu0 0.0
    %1506 = vmatprep.subr.mxu0 0.0
    %1507 = vmatpush1.msra.mxu0 0.0
    %1508 = vmatprep.subr.mxu0 0.0
    %1509 = vmatpush1.msra.mxu0 0.0
    %1510 = vmatprep.subr.mxu0 0.0
    %1511 = vmatpush1.msra.mxu0 0.0
    %1512 = vmatprep.subr.mxu0 0.0
    %1513 = vmatpush1.msra.mxu0 0.0
    %1514 = vmatprep.subr.mxu0 0.0
    %1515 = vmatpush1.msra.mxu0 0.0
    %1516 = vmatprep.subr.mxu0 0.0
    %1517 = vmatpush1.msra.mxu0 0.0
    %1518 = vmatprep.subr.mxu0 0.0
    %1519 = vmatpush1.msra.mxu0 0.0
    %1520 = vmatprep.subr.mxu0 0.0
    %1521 = vmatpush1.msra.mxu0 0.0
    %1522 = vmatprep.subr.mxu0 0.0
    %1523 = vmatpush1.msra.mxu0 0.0
    %1524 = vmatprep.subr.mxu0 0.0
    %1525 = vmatpush1.msra.mxu0 0.0
    %1526 = vmatprep.subr.mxu0 0.0
    %1527 = vmatpush1.msra.mxu0 0.0
    %1528 = vmatprep.subr.mxu0 0.0
    %1529 = vmatpush1.msra.mxu0 0.0
    %1530 = vmatprep.subr.mxu0 0.0
    %1531 = vmatpush1.msra.mxu0 0.0
    %1532 = vmatprep.subr.mxu0 0.0
    %1533 = vmatpush1.msra.mxu0 0.0
    %1534 = vmatprep.subr.mxu0 0.0
    %1535 = vmatpush1.msra.mxu0 0.0
    %1536 = vmatprep.subr.mxu0 0.0
    %1537 = vmatpush1.msra.mxu0 0.0
    %1538 = vmatprep.subr.mxu0 0.0
    %1539 = vmatpush1.msra.mxu0 0.0
    %1540 = vmatprep.mubr.f32.mxu0 0.0
    %1541 = vmatmul.mubr.f32.gmra.mrb[0].mxu0 %v1334
    %v1542 = vpop.f32.mrb[0].mxu0
    %v1543 = vadd.f32 %v277, %v1542
    %v1544 = vpop.f32.mrb[0].mxu0
    %1545 = vdwg.mxu0
    %s1546 = scalar_lea.vmem [#allocation2], 10
    %v1547 = vld [vmem:[%s1546] sm:$0x3]
    %v1548 = vadd.f32 %v1547, %v1403
    %v1549 = vxor.u32 %v1548, 2147483648
    %v1550 = vmul.f32 %v1549, 1.442695
    %v1551 = vpow.pop %v1550
    %v1552 = vadd.f32 %v1551, 1.0
    %v1553 = vrcp.pop %v1552
    %v1554 = vmul.f32 1.0, %v1553
    %s1555 = scalar_lea.vmem [#allocation5], 10
    %v1556 = vld [vmem:[%s1555] sm:$0x3]
    %v1557 = vadd.f32 %v1556, %v1473
    %v1558 = vxor.u32 %v1557, 2147483648
    %v1559 = vmul.f32 %v1558, 1.442695
    %v1560 = vpow.pop %v1559
    %v1561 = vadd.f32 %v1560, 1.0
    %v1562 = vrcp.pop %v1561
    %v1563 = vmul.f32 1.0, %v1562
    %s1564 = scalar_lea.vmem [#allocation7], 10
    %v1565 = vld [vmem:[%s1564] sm:$0x3]
    %v1566 = vmul.f32 %v1554, %v1543
    %v1567 = vadd.f32 %v1565, %v1566
    %v1568 = vtanh.pop %v1567
    %v1569 = vsub.f32 1.0, %v1563
    %v1570 = vmul.f32 %v1569, %v1568
    %v1571 = vmul.f32 %v1563, %v1332
    %v1572 = vadd.f32 %v1570, %v1571
    %v1574 = vsel %vm129, %v1572, 0
    %1576 = vmatprep.subr.mxu0 0.0
    %1577 = vmatpush1.msra.mxu0 %v115
    %1578 = vmatprep.subr.mxu0 0.0
    %1579 = vmatpush1.msra.mxu0 %v116
    %1580 = vmatprep.subr.mxu0 0.0
    %1581 = vmatpush1.msra.mxu0 %v117
    %1582 = vmatprep.subr.mxu0 0.0
    %1583 = vmatpush1.msra.mxu0 %v118
    %1584 = vmatprep.subr.mxu0 0.0
    %1585 = vmatpush1.msra.mxu0 0.0
    %1586 = vmatprep.subr.mxu0 0.0
    %1587 = vmatpush1.msra.mxu0 0.0
    %1588 = vmatprep.subr.mxu0 0.0
    %1589 = vmatpush1.msra.mxu0 0.0
    %1590 = vmatprep.subr.mxu0 0.0
    %1591 = vmatpush1.msra.mxu0 0.0
    %1592 = vmatprep.subr.mxu0 0.0
    %1593 = vmatpush1.msra.mxu0 0.0
    %1594 = vmatprep.subr.mxu0 0.0
    %1595 = vmatpush1.msra.mxu0 0.0
    %1596 = vmatprep.subr.mxu0 0.0
    %1597 = vmatpush1.msra.mxu0 0.0
    %1598 = vmatprep.subr.mxu0 0.0
    %1599 = vmatpush1.msra.mxu0 0.0
    %1600 = vmatprep.subr.mxu0 0.0
    %1601 = vmatpush1.msra.mxu0 0.0
    %1602 = vmatprep.subr.mxu0 0.0
    %1603 = vmatpush1.msra.mxu0 0.0
    %1604 = vmatprep.subr.mxu0 0.0
    %1605 = vmatpush1.msra.mxu0 0.0
    %1606 = vmatprep.subr.mxu0 0.0
    %1607 = vmatpush1.msra.mxu0 0.0
    %1608 = vmatprep.subr.mxu0 0.0
    %1609 = vmatpush1.msra.mxu0 0.0
    %1610 = vmatprep.subr.mxu0 0.0
    %1611 = vmatpush1.msra.mxu0 0.0
    %1612 = vmatprep.subr.mxu0 0.0
    %1613 = vmatpush1.msra.mxu0 0.0
    %1614 = vmatprep.subr.mxu0 0.0
    %1615 = vmatpush1.msra.mxu0 0.0
    %1616 = vmatprep.subr.mxu0 0.0
    %1617 = vmatpush1.msra.mxu0 0.0
    %1618 = vmatprep.subr.mxu0 0.0
    %1619 = vmatpush1.msra.mxu0 0.0
    %1620 = vmatprep.subr.mxu0 0.0
    %1621 = vmatpush1.msra.mxu0 0.0
    %1622 = vmatprep.subr.mxu0 0.0
    %1623 = vmatpush1.msra.mxu0 0.0
    %1624 = vmatprep.subr.mxu0 0.0
    %1625 = vmatpush1.msra.mxu0 0.0
    %1626 = vmatprep.subr.mxu0 0.0
    %1627 = vmatpush1.msra.mxu0 0.0
    %1628 = vmatprep.subr.mxu0 0.0
    %1629 = vmatpush1.msra.mxu0 0.0
    %1630 = vmatprep.subr.mxu0 0.0
    %1631 = vmatpush1.msra.mxu0 0.0
    %1632 = vmatprep.subr.mxu0 0.0
    %1633 = vmatpush1.msra.mxu0 0.0
    %1634 = vmatprep.subr.mxu0 0.0
    %1635 = vmatpush1.msra.mxu0 0.0
    %1636 = vmatprep.subr.mxu0 0.0
    %1637 = vmatpush1.msra.mxu0 0.0
    %1638 = vmatprep.subr.mxu0 0.0
    %1639 = vmatpush1.msra.mxu0 0.0
    %1640 = vmatprep.mubr.f32.mxu0 0.0
    %1641 = vmatmul.mubr.f32.gmra.mrb[0].mxu0 %v1574
    %v1642 = vpop.f32.mrb[0].mxu0
    %v1643 = vadd.f32 0.0, %v1642
    %v1644 = vpop.f32.mrb[0].mxu0
    %1645 = vdwg.mxu0
    %1646 = vmatprep.subr.mxu0 0.0
    %1647 = vmatpush1.msra.mxu0 %v119
    %1648 = vmatprep.subr.mxu0 0.0
    %1649 = vmatpush1.msra.mxu0 %v120
    %1650 = vmatprep.subr.mxu0 0.0
    %1651 = vmatpush1.msra.mxu0 %v121
    %1652 = vmatprep.subr.mxu0 0.0
    %1653 = vmatpush1.msra.mxu0 %v122
    %1654 = vmatprep.subr.mxu0 0.0
    %1655 = vmatpush1.msra.mxu0 0.0
    %1656 = vmatprep.subr.mxu0 0.0
    %1657 = vmatpush1.msra.mxu0 0.0
    %1658 = vmatprep.subr.mxu0 0.0
    %1659 = vmatpush1.msra.mxu0 0.0
    %1660 = vmatprep.subr.mxu0 0.0
    %1661 = vmatpush1.msra.mxu0 0.0
    %1662 = vmatprep.subr.mxu0 0.0
    %1663 = vmatpush1.msra.mxu0 0.0
    %1664 = vmatprep.subr.mxu0 0.0
    %1665 = vmatpush1.msra.mxu0 0.0
    %1666 = vmatprep.subr.mxu0 0.0
    %1667 = vmatpush1.msra.mxu0 0.0
    %1668 = vmatprep.subr.mxu0 0.0
    %1669 = vmatpush1.msra.mxu0 0.0
    %1670 = vmatprep.subr.mxu0 0.0
    %1671 = vmatpush1.msra.mxu0 0.0
    %1672 = vmatprep.subr.mxu0 0.0
    %1673 = vmatpush1.msra.mxu0 0.0
    %1674 = vmatprep.subr.mxu0 0.0
    %1675 = vmatpush1.msra.mxu0 0.0
    %1676 = vmatprep.subr.mxu0 0.0
    %1677 = vmatpush1.msra.mxu0 0.0
    %1678 = vmatprep.subr.mxu0 0.0
    %1679 = vmatpush1.msra.mxu0 0.0
    %1680 = vmatprep.subr.mxu0 0.0
    %1681 = vmatpush1.msra.mxu0 0.0
    %1682 = vmatprep.subr.mxu0 0.0
    %1683 = vmatpush1.msra.mxu0 0.0
    %1684 = vmatprep.subr.mxu0 0.0
    %1685 = vmatpush1.msra.mxu0 0.0
    %1686 = vmatprep.subr.mxu0 0.0
    %1687 = vmatpush1.msra.mxu0 0.0
    %1688 = vmatprep.subr.mxu0 0.0
    %1689 = vmatpush1.msra.mxu0 0.0
    %1690 = vmatprep.subr.mxu0 0.0
    %1691 = vmatpush1.msra.mxu0 0.0
    %1692 = vmatprep.subr.mxu0 0.0
    %1693 = vmatpush1.msra.mxu0 0.0
    %1694 = vmatprep.subr.mxu0 0.0
    %1695 = vmatpush1.msra.mxu0 0.0
    %1696 = vmatprep.subr.mxu0 0.0
    %1697 = vmatpush1.msra.mxu0 0.0
    %1698 = vmatprep.subr.mxu0 0.0
    %1699 = vmatpush1.msra.mxu0 0.0
    %1700 = vmatprep.subr.mxu0 0.0
    %1701 = vmatpush1.msra.mxu0 0.0
    %1702 = vmatprep.subr.mxu0 0.0
    %1703 = vmatpush1.msra.mxu0 0.0
    %1704 = vmatprep.subr.mxu0 0.0
    %1705 = vmatpush1.msra.mxu0 0.0
    %1706 = vmatprep.subr.mxu0 0.0
    %1707 = vmatpush1.msra.mxu0 0.0
    %1708 = vmatprep.subr.mxu0 0.0
    %1709 = vmatpush1.msra.mxu0 0.0
    %1710 = vmatprep.mubr.f32.mxu0 0.0
    %1711 = vmatmul.mubr.f32.gmra.mrb[0].mxu0 %v1574
    %v1712 = vpop.f32.mrb[0].mxu0
    %v1713 = vadd.f32 0.0, %v1712
    %v1714 = vpop.f32.mrb[0].mxu0
    %1715 = vdwg.mxu0
    %1716 = vmatprep.subr.mxu0 0.0
    %1717 = vmatpush1.msra.mxu0 %v123
    %1718 = vmatprep.subr.mxu0 0.0
    %1719 = vmatpush1.msra.mxu0 %v124
    %1720 = vmatprep.subr.mxu0 0.0
    %1721 = vmatpush1.msra.mxu0 %v125
    %1722 = vmatprep.subr.mxu0 0.0
    %1723 = vmatpush1.msra.mxu0 %v126
    %1724 = vmatprep.subr.mxu0 0.0
    %1725 = vmatpush1.msra.mxu0 0.0
    %1726 = vmatprep.subr.mxu0 0.0
    %1727 = vmatpush1.msra.mxu0 0.0
    %1728 = vmatprep.subr.mxu0 0.0
    %1729 = vmatpush1.msra.mxu0 0.0
    %1730 = vmatprep.subr.mxu0 0.0
    %1731 = vmatpush1.msra.mxu0 0.0
    %1732 = vmatprep.subr.mxu0 0.0
    %1733 = vmatpush1.msra.mxu0 0.0
    %1734 = vmatprep.subr.mxu0 0.0
    %1735 = vmatpush1.msra.mxu0 0.0
    %1736 = vmatprep.subr.mxu0 0.0
    %1737 = vmatpush1.msra.mxu0 0.0
    %1738 = vmatprep.subr.mxu0 0.0
    %1739 = vmatpush1.msra.mxu0 0.0
    %1740 = vmatprep.subr.mxu0 0.0
    %1741 = vmatpush1.msra.mxu0 0.0
    %1742 = vmatprep.subr.mxu0 0.0
    %1743 = vmatpush1.msra.mxu0 0.0
    %1744 = vmatprep.subr.mxu0 0.0
    %1745 = vmatpush1.msra.mxu0 0.0
    %1746 = vmatprep.subr.mxu0 0.0
    %1747 = vmatpush1.msra.mxu0 0.0
    %1748 = vmatprep.subr.mxu0 0.0
    %1749 = vmatpush1.msra.mxu0 0.0
    %1750 = vmatprep.subr.mxu0 0.0
    %1751 = vmatpush1.msra.mxu0 0.0
    %1752 = vmatprep.subr.mxu0 0.0
    %1753 = vmatpush1.msra.mxu0 0.0
    %1754 = vmatprep.subr.mxu0 0.0
    %1755 = vmatpush1.msra.mxu0 0.0
    %1756 = vmatprep.subr.mxu0 0.0
    %1757 = vmatpush1.msra.mxu0 0.0
    %1758 = vmatprep.subr.mxu0 0.0
    %1759 = vmatpush1.msra.mxu0 0.0
    %1760 = vmatprep.subr.mxu0 0.0
    %1761 = vmatpush1.msra.mxu0 0.0
    %1762 = vmatprep.subr.mxu0 0.0
    %1763 = vmatpush1.msra.mxu0 0.0
    %1764 = vmatprep.subr.mxu0 0.0
    %1765 = vmatpush1.msra.mxu0 0.0
    %1766 = vmatprep.subr.mxu0 0.0
    %1767 = vmatpush1.msra.mxu0 0.0
    %1768 = vmatprep.subr.mxu0 0.0
    %1769 = vmatpush1.msra.mxu0 0.0
    %1770 = vmatprep.subr.mxu0 0.0
    %1771 = vmatpush1.msra.mxu0 0.0
    %1772 = vmatprep.subr.mxu0 0.0
    %1773 = vmatpush1.msra.mxu0 0.0
    %1774 = vmatprep.subr.mxu0 0.0
    %1775 = vmatpush1.msra.mxu0 0.0
    %1776 = vmatprep.subr.mxu0 0.0
    %1777 = vmatpush1.msra.mxu0 0.0
    %1778 = vmatprep.subr.mxu0 0.0
    %1779 = vmatpush1.msra.mxu0 0.0
    %1780 = vmatprep.mubr.f32.mxu0 0.0
    %1781 = vmatmul.mubr.f32.gmra.mrb[0].mxu0 %v1574
    %v1782 = vpop.f32.mrb[0].mxu0
    %v1783 = vadd.f32 %v277, %v1782
    %v1784 = vpop.f32.mrb[0].mxu0
    %1785 = vdwg.mxu0
    %s1786 = scalar_lea.vmem [#allocation2], 12
    %v1787 = vld [vmem:[%s1786] sm:$0x3]
    %v1788 = vadd.f32 %v1787, %v1643
    %v1789 = vxor.u32 %v1788, 2147483648
    %v1790 = vmul.f32 %v1789, 1.442695
    %v1791 = vpow.pop %v1790
    %v1792 = vadd.f32 %v1791, 1.0
    %v1793 = vrcp.pop %v1792
    %v1794 = vmul.f32 1.0, %v1793
    %s1795 = scalar_lea.vmem [#allocation5], 12
    %v1796 = vld [vmem:[%s1795] sm:$0x3]
    %v1797 = vadd.f32 %v1796, %v1713
    %v1798 = vxor.u32 %v1797, 2147483648
    %v1799 = vmul.f32 %v1798, 1.442695
    %v1800 = vpow.pop %v1799
    %v1801 = vadd.f32 %v1800, 1.0
    %v1802 = vrcp.pop %v1801
    %v1803 = vmul.f32 1.0, %v1802
    %s1804 = scalar_lea.vmem [#allocation7], 12
    %v1805 = vld [vmem:[%s1804] sm:$0x3]
    %v1806 = vmul.f32 %v1794, %v1783
    %v1807 = vadd.f32 %v1805, %v1806
    %v1808 = vtanh.pop %v1807
    %v1809 = vsub.f32 1.0, %v1803
    %v1810 = vmul.f32 %v1809, %v1808
    %v1811 = vmul.f32 %v1803, %v1572
    %v1812 = vadd.f32 %v1810, %v1811
    %v1814 = vsel %vm129, %v1812, 0
    %1816 = vmatprep.subr.mxu0 0.0
    %1817 = vmatpush1.msra.mxu0 %v115
    %1818 = vmatprep.subr.mxu0 0.0
    %1819 = vmatpush1.msra.mxu0 %v116
    %1820 = vmatprep.subr.mxu0 0.0
    %1821 = vmatpush1.msra.mxu0 %v117
    %1822 = vmatprep.subr.mxu0 0.0
    %1823 = vmatpush1.msra.mxu0 %v118
    %1824 = vmatprep.subr.mxu0 0.0
    %1825 = vmatpush1.msra.mxu0 0.0
    %1826 = vmatprep.subr.mxu0 0.0
    %1827 = vmatpush1.msra.mxu0 0.0
    %1828 = vmatprep.subr.mxu0 0.0
    %1829 = vmatpush1.msra.mxu0 0.0
    %1830 = vmatprep.subr.mxu0 0.0
    %1831 = vmatpush1.msra.mxu0 0.0
    %1832 = vmatprep.subr.mxu0 0.0
    %1833 = vmatpush1.msra.mxu0 0.0
    %1834 = vmatprep.subr.mxu0 0.0
    %1835 = vmatpush1.msra.mxu0 0.0
    %1836 = vmatprep.subr.mxu0 0.0
    %1837 = vmatpush1.msra.mxu0 0.0
    %1838 = vmatprep.subr.mxu0 0.0
    %1839 = vmatpush1.msra.mxu0 0.0
    %1840 = vmatprep.subr.mxu0 0.0
    %1841 = vmatpush1.msra.mxu0 0.0
    %1842 = vmatprep.subr.mxu0 0.0
    %1843 = vmatpush1.msra.mxu0 0.0
    %1844 = vmatprep.subr.mxu0 0.0
    %1845 = vmatpush1.msra.mxu0 0.0
    %1846 = vmatprep.subr.mxu0 0.0
    %1847 = vmatpush1.msra.mxu0 0.0
    %1848 = vmatprep.subr.mxu0 0.0
    %1849 = vmatpush1.msra.mxu0 0.0
    %1850 = vmatprep.subr.mxu0 0.0
    %1851 = vmatpush1.msra.mxu0 0.0
    %1852 = vmatprep.subr.mxu0 0.0
    %1853 = vmatpush1.msra.mxu0 0.0
    %1854 = vmatprep.subr.mxu0 0.0
    %1855 = vmatpush1.msra.mxu0 0.0
    %1856 = vmatprep.subr.mxu0 0.0
    %1857 = vmatpush1.msra.mxu0 0.0
    %1858 = vmatprep.subr.mxu0 0.0
    %1859 = vmatpush1.msra.mxu0 0.0
    %1860 = vmatprep.subr.mxu0 0.0
    %1861 = vmatpush1.msra.mxu0 0.0
    %1862 = vmatprep.subr.mxu0 0.0
    %1863 = vmatpush1.msra.mxu0 0.0
    %1864 = vmatprep.subr.mxu0 0.0
    %1865 = vmatpush1.msra.mxu0 0.0
    %1866 = vmatprep.subr.mxu0 0.0
    %1867 = vmatpush1.msra.mxu0 0.0
    %1868 = vmatprep.subr.mxu0 0.0
    %1869 = vmatpush1.msra.mxu0 0.0
    %1870 = vmatprep.subr.mxu0 0.0
    %1871 = vmatpush1.msra.mxu0 0.0
    %1872 = vmatprep.subr.mxu0 0.0
    %1873 = vmatpush1.msra.mxu0 0.0
    %1874 = vmatprep.subr.mxu0 0.0
    %1875 = vmatpush1.msra.mxu0 0.0
    %1876 = vmatprep.subr.mxu0 0.0
    %1877 = vmatpush1.msra.mxu0 0.0
    %1878 = vmatprep.subr.mxu0 0.0
    %1879 = vmatpush1.msra.mxu0 0.0
    %1880 = vmatprep.mubr.f32.mxu0 0.0
    %1881 = vmatmul.mubr.f32.gmra.mrb[0].mxu0 %v1814
    %v1882 = vpop.f32.mrb[0].mxu0
    %v1883 = vadd.f32 0.0, %v1882
    %v1884 = vpop.f32.mrb[0].mxu0
    %1885 = vdwg.mxu0
    %1886 = vmatprep.subr.mxu0 0.0
    %1887 = vmatpush1.msra.mxu0 %v119
    %1888 = vmatprep.subr.mxu0 0.0
    %1889 = vmatpush1.msra.mxu0 %v120
    %1890 = vmatprep.subr.mxu0 0.0
    %1891 = vmatpush1.msra.mxu0 %v121
    %1892 = vmatprep.subr.mxu0 0.0
    %1893 = vmatpush1.msra.mxu0 %v122
    %1894 = vmatprep.subr.mxu0 0.0
    %1895 = vmatpush1.msra.mxu0 0.0
    %1896 = vmatprep.subr.mxu0 0.0
    %1897 = vmatpush1.msra.mxu0 0.0
    %1898 = vmatprep.subr.mxu0 0.0
    %1899 = vmatpush1.msra.mxu0 0.0
    %1900 = vmatprep.subr.mxu0 0.0
    %1901 = vmatpush1.msra.mxu0 0.0
    %1902 = vmatprep.subr.mxu0 0.0
    %1903 = vmatpush1.msra.mxu0 0.0
    %1904 = vmatprep.subr.mxu0 0.0
    %1905 = vmatpush1.msra.mxu0 0.0
    %1906 = vmatprep.subr.mxu0 0.0
    %1907 = vmatpush1.msra.mxu0 0.0
    %1908 = vmatprep.subr.mxu0 0.0
    %1909 = vmatpush1.msra.mxu0 0.0
    %1910 = vmatprep.subr.mxu0 0.0
    %1911 = vmatpush1.msra.mxu0 0.0
    %1912 = vmatprep.subr.mxu0 0.0
    %1913 = vmatpush1.msra.mxu0 0.0
    %1914 = vmatprep.subr.mxu0 0.0
    %1915 = vmatpush1.msra.mxu0 0.0
    %1916 = vmatprep.subr.mxu0 0.0
    %1917 = vmatpush1.msra.mxu0 0.0
    %1918 = vmatprep.subr.mxu0 0.0
    %1919 = vmatpush1.msra.mxu0 0.0
    %1920 = vmatprep.subr.mxu0 0.0
    %1921 = vmatpush1.msra.mxu0 0.0
    %1922 = vmatprep.subr.mxu0 0.0
    %1923 = vmatpush1.msra.mxu0 0.0
    %1924 = vmatprep.subr.mxu0 0.0
    %1925 = vmatpush1.msra.mxu0 0.0
    %1926 = vmatprep.subr.mxu0 0.0
    %1927 = vmatpush1.msra.mxu0 0.0
    %1928 = vmatprep.subr.mxu0 0.0
    %1929 = vmatpush1.msra.mxu0 0.0
    %1930 = vmatprep.subr.mxu0 0.0
    %1931 = vmatpush1.msra.mxu0 0.0
    %1932 = vmatprep.subr.mxu0 0.0
    %1933 = vmatpush1.msra.mxu0 0.0
    %1934 = vmatprep.subr.mxu0 0.0
    %1935 = vmatpush1.msra.mxu0 0.0
    %1936 = vmatprep.subr.mxu0 0.0
    %1937 = vmatpush1.msra.mxu0 0.0
    %1938 = vmatprep.subr.mxu0 0.0
    %1939 = vmatpush1.msra.mxu0 0.0
    %1940 = vmatprep.subr.mxu0 0.0
    %1941 = vmatpush1.msra.mxu0 0.0
    %1942 = vmatprep.subr.mxu0 0.0
    %1943 = vmatpush1.msra.mxu0 0.0
    %1944 = vmatprep.subr.mxu0 0.0
    %1945 = vmatpush1.msra.mxu0 0.0
    %1946 = vmatprep.subr.mxu0 0.0
    %1947 = vmatpush1.msra.mxu0 0.0
    %1948 = vmatprep.subr.mxu0 0.0
    %1949 = vmatpush1.msra.mxu0 0.0
    %1950 = vmatprep.mubr.f32.mxu0 0.0
    %1951 = vmatmul.mubr.f32.gmra.mrb[0].mxu0 %v1814
    %v1952 = vpop.f32.mrb[0].mxu0
    %v1953 = vadd.f32 0.0, %v1952
    %v1954 = vpop.f32.mrb[0].mxu0
    %1955 = vdwg.mxu0
    %1956 = vmatprep.subr.mxu0 0.0
    %1957 = vmatpush1.msra.mxu0 %v123
    %1958 = vmatprep.subr.mxu0 0.0
    %1959 = vmatpush1.msra.mxu0 %v124
    %1960 = vmatprep.subr.mxu0 0.0
    %1961 = vmatpush1.msra.mxu0 %v125
    %1962 = vmatprep.subr.mxu0 0.0
    %1963 = vmatpush1.msra.mxu0 %v126
    %1964 = vmatprep.subr.mxu0 0.0
    %1965 = vmatpush1.msra.mxu0 0.0
    %1966 = vmatprep.subr.mxu0 0.0
    %1967 = vmatpush1.msra.mxu0 0.0
    %1968 = vmatprep.subr.mxu0 0.0
    %1969 = vmatpush1.msra.mxu0 0.0
    %1970 = vmatprep.subr.mxu0 0.0
    %1971 = vmatpush1.msra.mxu0 0.0
    %1972 = vmatprep.subr.mxu0 0.0
    %1973 = vmatpush1.msra.mxu0 0.0
    %1974 = vmatprep.subr.mxu0 0.0
    %1975 = vmatpush1.msra.mxu0 0.0
    %1976 = vmatprep.subr.mxu0 0.0
    %1977 = vmatpush1.msra.mxu0 0.0
    %1978 = vmatprep.subr.mxu0 0.0
    %1979 = vmatpush1.msra.mxu0 0.0
    %1980 = vmatprep.subr.mxu0 0.0
    %1981 = vmatpush1.msra.mxu0 0.0
    %1982 = vmatprep.subr.mxu0 0.0
    %1983 = vmatpush1.msra.mxu0 0.0
    %1984 = vmatprep.subr.mxu0 0.0
    %1985 = vmatpush1.msra.mxu0 0.0
    %1986 = vmatprep.subr.mxu0 0.0
    %1987 = vmatpush1.msra.mxu0 0.0
    %1988 = vmatprep.subr.mxu0 0.0
    %1989 = vmatpush1.msra.mxu0 0.0
    %1990 = vmatprep.subr.mxu0 0.0
    %1991 = vmatpush1.msra.mxu0 0.0
    %1992 = vmatprep.subr.mxu0 0.0
    %1993 = vmatpush1.msra.mxu0 0.0
    %1994 = vmatprep.subr.mxu0 0.0
    %1995 = vmatpush1.msra.mxu0 0.0
    %1996 = vmatprep.subr.mxu0 0.0
    %1997 = vmatpush1.msra.mxu0 0.0
    %1998 = vmatprep.subr.mxu0 0.0
    %1999 = vmatpush1.msra.mxu0 0.0
    %2000 = vmatprep.subr.mxu0 0.0
    %2001 = vmatpush1.msra.mxu0 0.0
    %2002 = vmatprep.subr.mxu0 0.0
    %2003 = vmatpush1.msra.mxu0 0.0
    %2004 = vmatprep.subr.mxu0 0.0
    %2005 = vmatpush1.msra.mxu0 0.0
    %2006 = vmatprep.subr.mxu0 0.0
    %2007 = vmatpush1.msra.mxu0 0.0
    %2008 = vmatprep.subr.mxu0 0.0
    %2009 = vmatpush1.msra.mxu0 0.0
    %2010 = vmatprep.subr.mxu0 0.0
    %2011 = vmatpush1.msra.mxu0 0.0
    %2012 = vmatprep.subr.mxu0 0.0
    %2013 = vmatpush1.msra.mxu0 0.0
    %2014 = vmatprep.subr.mxu0 0.0
    %2015 = vmatpush1.msra.mxu0 0.0
    %2016 = vmatprep.subr.mxu0 0.0
    %2017 = vmatpush1.msra.mxu0 0.0
    %2018 = vmatprep.subr.mxu0 0.0
    %2019 = vmatpush1.msra.mxu0 0.0
    %2020 = vmatprep.mubr.f32.mxu0 0.0
    %2021 = vmatmul.mubr.f32.gmra.mrb[0].mxu0 %v1814
    %v2022 = vpop.f32.mrb[0].mxu0
    %v2023 = vadd.f32 %v277, %v2022
    %v2024 = vpop.f32.mrb[0].mxu0
    %2025 = vdwg.mxu0
    %s2026 = scalar_lea.vmem [#allocation2], 14
    %v2027 = vld [vmem:[%s2026] sm:$0x3]
    %v2028 = vadd.f32 %v2027, %v1883
    %v2029 = vxor.u32 %v2028, 2147483648
    %v2030 = vmul.f32 %v2029, 1.442695
    %v2031 = vpow.pop %v2030
    %v2032 = vadd.f32 %v2031, 1.0
    %v2033 = vrcp.pop %v2032
    %v2034 = vmul.f32 1.0, %v2033
    %s2035 = scalar_lea.vmem [#allocation5], 14
    %v2036 = vld [vmem:[%s2035] sm:$0x3]
    %v2037 = vadd.f32 %v2036, %v1953
    %v2038 = vxor.u32 %v2037, 2147483648
    %v2039 = vmul.f32 %v2038, 1.442695
    %v2040 = vpow.pop %v2039
    %v2041 = vadd.f32 %v2040, 1.0
    %v2042 = vrcp.pop %v2041
    %v2043 = vmul.f32 1.0, %v2042
    %s2044 = scalar_lea.vmem [#allocation7], 14
    %v2045 = vld [vmem:[%s2044] sm:$0x3]
    %v2046 = vmul.f32 %v2034, %v2023
    %v2047 = vadd.f32 %v2045, %v2046
    %v2048 = vtanh.pop %v2047
    %v2049 = vsub.f32 1.0, %v2043
    %v2050 = vmul.f32 %v2049, %v2048
    %v2051 = vmul.f32 %v2043, %v1812
    %v2052 = vadd.f32 %v2050, %v2051
    %vm2053 = vcmask 254976
    %2054 = vst.msk [vmem:[#allocation14] sm:$0x3] %vm2053, %v2052
    %v2055 = vmax.f32 %v2052, 0.0
    %2056 = vst.msk [vmem:[#allocation13] sm:$0x3] %vm2053, %v2055
    // Predicated region
    $region58: #{tpu_custom_call.1} parent=1 // pred_check
      _
    $region59: #{tpu_custom_call.1} parent=1 // pred_check_branch
      %2058 = sbr.rel (0) target = $region61
    $region60: #{tpu_custom_call.1} parent=1 // pred_region
      %s2060 = ssub.s32 32, 32
      %2061 = vsyncadd [#allocation4], %s2060
      %s2063 = sshll.u32 [#allocation13], 4
      %s2064 = int_to_ptr.vmem [resolvable:$true] %s2063
      %2066 = dma.vmem_to_hbm [thread:$0]  %s2064, 32, %s8, [#allocation4]
    $region61: #{tpu_custom_call.1} parent=1 // pred_fallthru
      _
    // Predicated region
    $region62: #{tpu_custom_call.1} parent=1 // pred_check
      _
    $region63: #{tpu_custom_call.1} parent=1 // pred_check_branch
      %2068 = sbr.rel (0) target = $region65
    $region64: #{tpu_custom_call.1} parent=1 // pred_region
      %s2070 = ssub.s32 32, 32
      %2071 = vsyncadd [#allocation15], %s2070
      %s2073 = sshll.u32 [#allocation14], 4
      %s2074 = int_to_ptr.vmem [resolvable:$true] %s2073
      %2076 = dma.vmem_to_hbm [thread:$0]  %s2074, 32, %s9, [#allocation15]
    $region65: #{tpu_custom_call.1} parent=1 // pred_fallthru
      _
    // Predicated region
    $region66: #{tpu_custom_call.1} parent=1 // pred_check
      _
    $region67: #{tpu_custom_call.1} parent=1 // pred_check_branch
      %2078 = sbr.rel (0) target = $region69
    $region68: #{tpu_custom_call.1} parent=1 // pred_region
      %2079 = dma.done [#allocation4], 32
    $region69: #{tpu_custom_call.1} parent=1 // pred_fallthru
      _
    // Predicated region
    $region70: #{tpu_custom_call.1} parent=1 // pred_check
      _
    $region71: #{tpu_custom_call.1} parent=1 // pred_check_branch
      %2081 = sbr.rel (0) target = $region73
    $region72: #{tpu_custom_call.1} parent=1 // pred_region
      %2082 = dma.done [#allocation15], 32
    $region73: #{tpu_custom_call.1} parent=1 // pred_fallthru
      _
    %2083 = vsyncpa [#allocation3], 1
    %2084 = vsyncpa [#allocation6], 1
    %2085 = vsyncpa [#allocation9], 1
    %2086 = vsyncpa [#allocation12], 1
    %2087 = vsyncpa [#allocation4], 1
    %2088 = vsyncpa [#allocation15], 1

</llo_original>
